<compile_context>
chip_gen: v6e
topology: v6e:2x2x1
jax: 0.10.0
libtpu: 0.0.40
codegen_flags: <defaults>
</compile_context>

<pallas_src>
import functools

import jax
import jax.numpy as jnp
import numpy as np
from jax.experimental import pallas as pl
from jax.experimental.pallas import tpu as pltpu

GATE = 8     # lanes reserved per GRU gate inside the packed 128-lane tile
BP = 8       # batch rows zero-padded to one sublane tile
IP = 8       # GRU input features zero-padded to 8 lanes
LANES = 128


# ----------------------------- Pallas kernel ------------------------------- #
def dqn_kernel(seq_ref,   # (T*BP, IP)   time-major GRU input, zero padded
               xs_ref,    # (BP, Fs+1)   static fc1 features, last col = ones
               wih_ref,   # (IP, 128)    GRU input weights, packed gate layout
               whh_ref,   # (8, 128)     GRU hidden weights, rows [0,H) valid
               w1s_ref,   # (Fs+1, 128)  fc1 static columns + b1 bias row
               w1g_ref,   # (8, 128)     fc1 GRU-embedding cols, rows [0,H) valid
               w2_ref,    # (128, 64)    fc2 weight (transposed)
               w3_ref,    # (64, 128)    fc3 weight (transposed), cols [0,k) valid
               bias_ref,  # (4, 128)     rows: gi bias | b_hn | b2 | b3
               out_ref,   # (BP, 128)    lane-dense output; Q-values in [:B, :k]
               *, hidden):
    bp = out_ref.shape[0]
    t_steps = seq_ref.shape[0] // bp

    whh = whh_ref[...]
    bias = bias_ref[...]
    bhn = bias[1:2, 0:GATE]          # (1, 8)   b_hn of the n gate
    b2 = bias[2:3, 0:64]             # (1, 64)
    b3 = bias[3:4, :]                # (1, 128)

    # Hoisted input-side GRU matmul for all timesteps (one MXU dot), with the
    # r/z (b_ih+b_hh) and n (b_in) biases folded in via the gi-bias row.
    gi = jnp.dot(seq_ref[...], wih_ref[...],
                 preferred_element_type=jnp.float32) + bias[0:1, :]   # (T*BP,128)

    # Serial recurrence, fully unrolled (T static and tiny).  The hidden-side
    # contribution is a rank-H VPU update so the MXU round trip stays off the
    # 8-step critical path.
    h = jnp.zeros((bp, GATE), jnp.float32)           # lanes [0,H) hold h_t
    for t in range(t_steps):
        g = gi[t * bp:(t + 1) * bp, :]               # (BP,128) tile-aligned view
        gh = h[:, 0:1] * whh[0:1, :]
        for j in range(1, hidden):
            gh = gh + h[:, j:j + 1] * whh[j:j + 1, :]              # (BP,128)
        rz = jax.nn.sigmoid(g[:, 0:2 * GATE] + gh[:, 0:2 * GATE])
        r = rz[:, 0:GATE]
        z = rz[:, GATE:2 * GATE]
        n = jnp.tanh(g[:, 2 * GATE:3 * GATE]
                     + r * (gh[:, 2 * GATE:3 * GATE] + bhn))
        h = (1.0 - z) * n + z * h                    # (BP,8); pad lanes stay 0

    # MLP head.  fc1 bias rides the ones column of xs (folded into w1s).
    z1 = jnp.maximum(
        jnp.dot(xs_ref[...], w1s_ref[...], preferred_element_type=jnp.float32)
        + jnp.dot(h, w1g_ref[...], preferred_element_type=jnp.float32), 0.0)
    z2 = jnp.maximum(
        jnp.dot(z1, w2_ref[...], preferred_element_type=jnp.float32) + b2, 0.0)
    out_ref[...] = (jnp.dot(z2, w3_ref[...], preferred_element_type=jnp.float32)
                    + b3)


# ------------------------- one-time weight packing -------------------------- #
def pack_params(params, *, k, hidden, cand_dim):
    """Pack/pad all weights ONCE (keep out of the per-call path)."""
    H = hidden
    w_ih, w_hh = params['gru_w_ih'], params['gru_w_hh']    # (3H, I), (3H, H)
    b_ih, b_hh = params['gru_b_ih'], params['gru_b_hh']
    in_size = w_ih.shape[1]

    wih = jnp.zeros((IP, LANES), jnp.float32)
    whh = jnp.zeros((GATE, LANES), jnp.float32)
    gib = jnp.zeros((LANES,), jnp.float32)
    for g in range(3):
        wih = wih.at[:in_size, g * GATE:g * GATE + H].set(w_ih[g * H:(g + 1) * H, :].T)
        whh = whh.at[:H, g * GATE:g * GATE + H].set(w_hh[g * H:(g + 1) * H, :].T)
    # r,z gates: b_ih + b_hh folded; n gate: b_in only (b_hn stays inside r*(...)).
    gib = gib.at[0 * GATE:0 * GATE + H].set(b_ih[0 * H:1 * H] + b_hh[0 * H:1 * H])
    gib = gib.at[1 * GATE:1 * GATE + H].set(b_ih[1 * H:2 * H] + b_hh[1 * H:2 * H])
    gib = gib.at[2 * GATE:2 * GATE + H].set(b_ih[2 * H:3 * H])

    W1, b1 = params['w1'], params['b1']                    # (128, in_dim), (128,)
    Ck = cand_dim
    w1_static = jnp.concatenate([W1[:, :Ck], W1[:, Ck + H:]], axis=1).T  # (Fs,128)
    w1s = jnp.concatenate([w1_static, b1[None, :]], axis=0)              # (Fs+1,128)
    w1g = jnp.zeros((GATE, LANES), jnp.float32).at[:H, :].set(W1[:, Ck:Ck + H].T)

    w2 = params['w2'].T                                                  # (128, 64)
    w3 = jnp.zeros((64, LANES), jnp.float32).at[:, :k].set(params['w3'].T)

    bias = jnp.zeros((4, LANES), jnp.float32)
    bias = bias.at[0, :].set(gib)
    bias = bias.at[1, :H].set(b_hh[2 * H:3 * H])
    bias = bias.at[2, :64].set(params['b2'])
    bias = bias.at[3, :k].set(params['b3'])

    packed = dict(wih=wih, whh=whh, w1s=w1s, w1g=w1g, w2=w2, w3=w3, bias=bias)
    return jax.tree_util.tree_map(jax.device_put, packed)


# ------------------------------- wrapper ----------------------------------- #
@functools.partial(jax.jit, static_argnames=('k', 'hidden'))
def dqn_pallas(candidate_state, solution_state, global_state, packed, *, k, hidden):
    seq = solution_state['sequence'].astype(jnp.float32)        # (B, T, I)
    B, T, I = seq.shape

    # Per-call activation prep (two small fusions; weights already packed).
    seq_tm = jnp.transpose(seq, (1, 0, 2))                      # (T, B, I)
    seq_aug = jnp.pad(seq_tm, ((0, 0), (0, BP - B), (0, IP - I))).reshape(T * BP, IP)

    cand_flat = candidate_state.reshape(B, -1).astype(jnp.float32)
    xs = jnp.concatenate(
        [cand_flat,
         solution_state['size'][:, None].astype(jnp.float32),
         solution_state['sum_items'][:, None].astype(jnp.float32),
         solution_state['coverage'][:, None].astype(jnp.float32),
         global_state.astype(jnp.float32),
         jnp.ones((B, 1), jnp.float32)], axis=1)                # (B, Fs+1)
    xs = jnp.pad(xs, ((0, BP - B), (0, 0)))                     # (BP, Fs+1)

    inputs = (seq_aug, xs, packed['wih'], packed['whh'], packed['w1s'],
              packed['w1g'], packed['w2'], packed['w3'], packed['bias'])

    def full_spec(x):
        nd = x.ndim
        return pl.BlockSpec(x.shape, lambda i, nd=nd: (0,) * nd)

    out = pl.pallas_call(
        functools.partial(dqn_kernel, hidden=hidden),
        grid=(1,),
        in_specs=[full_spec(x) for x in inputs],
        out_specs=pl.BlockSpec((BP, LANES), lambda i: (0, 0)),
        out_shape=jax.ShapeDtypeStruct((BP, LANES), jnp.float32),
        compiler_params=pltpu.CompilerParams(dimension_semantics=("arbitrary",)),
    )(*inputs)
    return out[:B, :k]


# --------------------------- pure-JAX reference ----------------------------- #
def dqn_reference(candidate_state, solution_state, global_state, params, *, k, hidden):
    seq = solution_state['sequence']
    B, T, _ = seq.shape
    H = hidden
    W_ih, W_hh = params['gru_w_ih'], params['gru_w_hh']
    b_ih, b_hh = params['gru_b_ih'], params['gru_b_hh']
    h = jnp.zeros((B, H), jnp.float32)
    for t in range(T):
        x_t = seq[:, t, :]
        gi = x_t @ W_ih.T + b_ih
        gh = h @ W_hh.T + b_hh
        r = jax.nn.sigmoid(gi[:, :H] + gh[:, :H])
        z = jax.nn.sigmoid(gi[:, H:2 * H] + gh[:, H:2 * H])
        n = jnp.tanh(gi[:, 2 * H:] + r * gh[:, 2 * H:])   # PyTorch: r*(W_hn h + b_hn)
        h = (1.0 - z) * n + z * h
    sol = jnp.concatenate([h,
                           solution_state['size'][:, None],
                           solution_state['sum_items'][:, None],
                           solution_state['coverage'][:, None]], axis=1)
    x = jnp.concatenate([candidate_state.reshape(B, -1), sol, global_state], axis=1)
    x = jax.nn.relu(x @ params['w1'].T + params['b1'])
    x = jax.nn.relu(x @ params['w2'].T + params['b2'])
    return x @ params['w3'].T + params['b3']


# ------------------------------ param init --------------------------------- #
def init_params(key, k, hidden, in_dim, input_size=3):
    keys = jax.random.split(key, 10)

    def U(kk, shape, fan_in):
        b = 1.0 / np.sqrt(fan_in)
        return jax.random.uniform(kk, shape, jnp.float32, -b, b)

    return dict(
        gru_w_ih=U(keys[0], (3 * hidden, input_size), hidden),
        gru_w_hh=U(keys[1], (3 * hidden, hidden), hidden),
        gru_b_ih=U(keys[2], (3 * hidden,), hidden),
        gru_b_hh=U(keys[3], (3 * hidden,), hidden),
        w1=U(keys[4], (128, in_dim), in_dim),
        b1=U(keys[5], (128,), in_dim),
        w2=U(keys[6], (64, 128), 128),
        b2=U(keys[7], (64,), 128),
        w3=U(keys[8], (k, 64), 64),
        b3=U(keys[9], (k,), 64),
    )


if __name__ == "__main__":
    B, k, hidden, T = 2, 3, 3, 8
    in_dim = 5 * k + 2 + hidden  # = 20; candidate(12) + gru(3) + size/sum/cov(3) + global(2)

    key = jax.random.PRNGKey(0)
    kc, ks, k1, k2, k3, kg, kp = jax.random.split(key, 7)

    candidate_state = jax.random.normal(kc, (B, k, 4), jnp.float32)   # flattens to 12
    solution_state = {
        'sequence': jax.random.normal(ks, (B, T, 3), jnp.float32),
        'size': jax.random.uniform(k1, (B,), jnp.float32),
        'sum_items': jax.random.normal(k2, (B,), jnp.float32),
        'coverage': jax.random.uniform(k3, (B,), jnp.float32),
    }
    global_state = jax.random.normal(kg, (B, 2), jnp.float32)
    params = init_params(kp, k, hidden, in_dim)

    # One-time weight packing (amortized across calls; not in the per-call path).
    packed = pack_params(params, k=k, hidden=hidden, cand_dim=4 * k)

    q_pallas = dqn_pallas(candidate_state, solution_state, global_state, packed,
                          k=k, hidden=hidden)
    q_pallas = jax.block_until_ready(q_pallas)

    q_ref = dqn_reference(candidate_state, solution_state, global_state, params,
                          k=k, hidden=hidden)

    assert q_pallas.shape == (B, k)
    np.testing.assert_allclose(np.asarray(q_pallas), np.asarray(q_ref),
                               rtol=1e-2, atol=1e-3)
    print("KERNEL_OK")
</pallas_src>

<mosaic_0001>
module attributes {stable_mosaic.version = 11 : i64} {
  func.func @dqn_kernel(%arg0: i32, %arg1: memref<64x8xf32, #tpu.memory_space<vmem>>, %arg2: memref<8x18xf32, #tpu.memory_space<vmem>>, %arg3: memref<8x128xf32, #tpu.memory_space<vmem>>, %arg4: memref<8x128xf32, #tpu.memory_space<vmem>>, %arg5: memref<18x128xf32, #tpu.memory_space<vmem>>, %arg6: memref<8x128xf32, #tpu.memory_space<vmem>>, %arg7: memref<128x64xf32, #tpu.memory_space<vmem>>, %arg8: memref<64x128xf32, #tpu.memory_space<vmem>>, %arg9: memref<4x128xf32, #tpu.memory_space<vmem>>, %arg10: memref<8x128xf32, #tpu.memory_space<vmem>>) attributes {dimension_semantics = [#tpu.dimension_semantics<arbitrary>], iteration_bounds = array<i64: 1>, scalar_prefetch = 0 : i64, scratch_operands = 0 : i64, tpu.core_type = #tpu.core_type<tc>, window_params = [{pipeline_mode = #tpu.pipeline_mode<synchronous>, transform_indices = @transform_0, window_bounds = array<i64: 64, 8>}, {pipeline_mode = #tpu.pipeline_mode<synchronous>, transform_indices = @transform_1, window_bounds = array<i64: 8, 18>}, {pipeline_mode = #tpu.pipeline_mode<synchronous>, transform_indices = @transform_2, window_bounds = array<i64: 8, 128>}, {pipeline_mode = #tpu.pipeline_mode<synchronous>, transform_indices = @transform_3, window_bounds = array<i64: 8, 128>}, {pipeline_mode = #tpu.pipeline_mode<synchronous>, transform_indices = @transform_4, window_bounds = array<i64: 18, 128>}, {pipeline_mode = #tpu.pipeline_mode<synchronous>, transform_indices = @transform_5, window_bounds = array<i64: 8, 128>}, {pipeline_mode = #tpu.pipeline_mode<synchronous>, transform_indices = @transform_6, window_bounds = array<i64: 128, 64>}, {pipeline_mode = #tpu.pipeline_mode<synchronous>, transform_indices = @transform_7, window_bounds = array<i64: 64, 128>}, {pipeline_mode = #tpu.pipeline_mode<synchronous>, transform_indices = @transform_8, window_bounds = array<i64: 4, 128>}, {pipeline_mode = #tpu.pipeline_mode<synchronous>, transform_indices = @transform_9, window_bounds = array<i64: 8, 128>}]} {
    %c0 = arith.constant 0 : index
    %c0_0 = arith.constant 0 : index
    %0 = vector.load %arg4[%c0, %c0_0] : memref<8x128xf32, #tpu.memory_space<vmem>>, vector<8x128xf32>
    %c0_1 = arith.constant 0 : index
    %c0_2 = arith.constant 0 : index
    %1 = vector.load %arg9[%c0_1, %c0_2] : memref<4x128xf32, #tpu.memory_space<vmem>>, vector<4x128xf32>
    %2 = vector.extract_strided_slice %1 {offsets = [1, 0], sizes = [1, 8], strides = [1, 1]} : vector<4x128xf32> to vector<1x8xf32>
    %3 = vector.extract_strided_slice %1 {offsets = [2, 0], sizes = [1, 64], strides = [1, 1]} : vector<4x128xf32> to vector<1x64xf32>
    %4 = vector.extract_strided_slice %1 {offsets = [3, 0], sizes = [1, 128], strides = [1, 1]} : vector<4x128xf32> to vector<1x128xf32>
    %c0_3 = arith.constant 0 : index
    %c0_4 = arith.constant 0 : index
    %5 = vector.load %arg1[%c0_3, %c0_4] : memref<64x8xf32, #tpu.memory_space<vmem>>, vector<64x8xf32>
    %c0_5 = arith.constant 0 : index
    %c0_6 = arith.constant 0 : index
    %6 = vector.load %arg3[%c0_5, %c0_6] : memref<8x128xf32, #tpu.memory_space<vmem>>, vector<8x128xf32>
    %cst = arith.constant dense<0.000000e+00> : vector<64x128xf32>
    %7 = tpu.matmul %5, %6, %cst {dimension_numbers = #tpu.dot_dimension_numbers<[1], [0], [0], [1], [0, 0, 1, 1], [], []>} : vector<64x8xf32>, vector<8x128xf32>, vector<64x128xf32> -> vector<64x128xf32>
    %8 = vector.extract_strided_slice %1 {offsets = [0, 0], sizes = [1, 128], strides = [1, 1]} : vector<4x128xf32> to vector<1x128xf32>
    %9 = vector.broadcast %8 : vector<1x128xf32> to vector<64x128xf32>
    %10 = arith.addf %7, %9 : vector<64x128xf32>
    %cst_7 = arith.constant 0.000000e+00 : f32
    %11 = vector.broadcast %cst_7 : f32 to vector<8x8xf32>
    %12 = vector.extract_strided_slice %10 {offsets = [0, 0], sizes = [8, 128], strides = [1, 1]} : vector<64x128xf32> to vector<8x128xf32>
    %13 = vector.extract_strided_slice %11 {offsets = [0, 0], sizes = [8, 1], strides = [1, 1]} : vector<8x8xf32> to vector<8x1xf32>
    %14 = vector.extract_strided_slice %0 {offsets = [0, 0], sizes = [1, 128], strides = [1, 1]} : vector<8x128xf32> to vector<1x128xf32>
    %15 = vector.broadcast %13 : vector<8x1xf32> to vector<8x128xf32>
    %16 = vector.broadcast %14 : vector<1x128xf32> to vector<8x128xf32>
    %17 = arith.mulf %15, %16 : vector<8x128xf32>
    %18 = vector.extract_strided_slice %11 {offsets = [0, 1], sizes = [8, 1], strides = [1, 1]} : vector<8x8xf32> to vector<8x1xf32>
    %19 = vector.extract_strided_slice %0 {offsets = [1, 0], sizes = [1, 128], strides = [1, 1]} : vector<8x128xf32> to vector<1x128xf32>
    %20 = vector.broadcast %18 : vector<8x1xf32> to vector<8x128xf32>
    %21 = vector.broadcast %19 : vector<1x128xf32> to vector<8x128xf32>
    %22 = arith.mulf %20, %21 : vector<8x128xf32>
    %23 = arith.addf %17, %22 : vector<8x128xf32>
    %24 = vector.extract_strided_slice %11 {offsets = [0, 2], sizes = [8, 1], strides = [1, 1]} : vector<8x8xf32> to vector<8x1xf32>
    %25 = vector.extract_strided_slice %0 {offsets = [2, 0], sizes = [1, 128], strides = [1, 1]} : vector<8x128xf32> to vector<1x128xf32>
    %26 = vector.broadcast %24 : vector<8x1xf32> to vector<8x128xf32>
    %27 = vector.broadcast %25 : vector<1x128xf32> to vector<8x128xf32>
    %28 = arith.mulf %26, %27 : vector<8x128xf32>
    %29 = arith.addf %23, %28 : vector<8x128xf32>
    %30 = vector.extract_strided_slice %12 {offsets = [0, 0], sizes = [8, 16], strides = [1, 1]} : vector<8x128xf32> to vector<8x16xf32>
    %31 = vector.extract_strided_slice %29 {offsets = [0, 0], sizes = [8, 16], strides = [1, 1]} : vector<8x128xf32> to vector<8x16xf32>
    %32 = arith.addf %30, %31 : vector<8x16xf32>
    %33 = arith.negf %32 : vector<8x16xf32>
    %34 = math.exp %33 : vector<8x16xf32>
    %cst_8 = arith.constant 1.000000e+00 : f32
    %35 = vector.broadcast %cst_8 : f32 to vector<8x16xf32>
    %36 = arith.addf %35, %34 : vector<8x16xf32>
    %37 = arith.divf %35, %36 : vector<8x16xf32>
    %38 = vector.extract_strided_slice %37 {offsets = [0, 0], sizes = [8, 8], strides = [1, 1]} : vector<8x16xf32> to vector<8x8xf32>
    %39 = vector.extract_strided_slice %37 {offsets = [0, 8], sizes = [8, 8], strides = [1, 1]} : vector<8x16xf32> to vector<8x8xf32>
    %40 = vector.extract_strided_slice %12 {offsets = [0, 16], sizes = [8, 8], strides = [1, 1]} : vector<8x128xf32> to vector<8x8xf32>
    %41 = vector.extract_strided_slice %29 {offsets = [0, 16], sizes = [8, 8], strides = [1, 1]} : vector<8x128xf32> to vector<8x8xf32>
    %42 = vector.broadcast %2 : vector<1x8xf32> to vector<8x8xf32>
    %43 = arith.addf %41, %42 : vector<8x8xf32>
    %44 = arith.mulf %38, %43 : vector<8x8xf32>
    %45 = arith.addf %40, %44 : vector<8x8xf32>
    %46 = math.tanh %45 : vector<8x8xf32>
    %cst_9 = arith.constant 1.000000e+00 : f32
    %47 = vector.broadcast %cst_9 : f32 to vector<8x8xf32>
    %48 = arith.subf %47, %39 : vector<8x8xf32>
    %49 = arith.mulf %48, %46 : vector<8x8xf32>
    %50 = arith.mulf %39, %11 : vector<8x8xf32>
    %51 = arith.addf %49, %50 : vector<8x8xf32>
    %52 = vector.extract_strided_slice %10 {offsets = [8, 0], sizes = [8, 128], strides = [1, 1]} : vector<64x128xf32> to vector<8x128xf32>
    %53 = vector.extract_strided_slice %51 {offsets = [0, 0], sizes = [8, 1], strides = [1, 1]} : vector<8x8xf32> to vector<8x1xf32>
    %54 = vector.extract_strided_slice %0 {offsets = [0, 0], sizes = [1, 128], strides = [1, 1]} : vector<8x128xf32> to vector<1x128xf32>
    %55 = vector.broadcast %53 : vector<8x1xf32> to vector<8x128xf32>
    %56 = vector.broadcast %54 : vector<1x128xf32> to vector<8x128xf32>
    %57 = arith.mulf %55, %56 : vector<8x128xf32>
    %58 = vector.extract_strided_slice %51 {offsets = [0, 1], sizes = [8, 1], strides = [1, 1]} : vector<8x8xf32> to vector<8x1xf32>
    %59 = vector.extract_strided_slice %0 {offsets = [1, 0], sizes = [1, 128], strides = [1, 1]} : vector<8x128xf32> to vector<1x128xf32>
    %60 = vector.broadcast %58 : vector<8x1xf32> to vector<8x128xf32>
    %61 = vector.broadcast %59 : vector<1x128xf32> to vector<8x128xf32>
    %62 = arith.mulf %60, %61 : vector<8x128xf32>
    %63 = arith.addf %57, %62 : vector<8x128xf32>
    %64 = vector.extract_strided_slice %51 {offsets = [0, 2], sizes = [8, 1], strides = [1, 1]} : vector<8x8xf32> to vector<8x1xf32>
    %65 = vector.extract_strided_slice %0 {offsets = [2, 0], sizes = [1, 128], strides = [1, 1]} : vector<8x128xf32> to vector<1x128xf32>
    %66 = vector.broadcast %64 : vector<8x1xf32> to vector<8x128xf32>
    %67 = vector.broadcast %65 : vector<1x128xf32> to vector<8x128xf32>
    %68 = arith.mulf %66, %67 : vector<8x128xf32>
    %69 = arith.addf %63, %68 : vector<8x128xf32>
    %70 = vector.extract_strided_slice %52 {offsets = [0, 0], sizes = [8, 16], strides = [1, 1]} : vector<8x128xf32> to vector<8x16xf32>
    %71 = vector.extract_strided_slice %69 {offsets = [0, 0], sizes = [8, 16], strides = [1, 1]} : vector<8x128xf32> to vector<8x16xf32>
    %72 = arith.addf %70, %71 : vector<8x16xf32>
    %73 = arith.negf %72 : vector<8x16xf32>
    %74 = math.exp %73 : vector<8x16xf32>
    %cst_10 = arith.constant 1.000000e+00 : f32
    %75 = vector.broadcast %cst_10 : f32 to vector<8x16xf32>
    %76 = arith.addf %75, %74 : vector<8x16xf32>
    %77 = arith.divf %75, %76 : vector<8x16xf32>
    %78 = vector.extract_strided_slice %77 {offsets = [0, 0], sizes = [8, 8], strides = [1, 1]} : vector<8x16xf32> to vector<8x8xf32>
    %79 = vector.extract_strided_slice %77 {offsets = [0, 8], sizes = [8, 8], strides = [1, 1]} : vector<8x16xf32> to vector<8x8xf32>
    %80 = vector.extract_strided_slice %52 {offsets = [0, 16], sizes = [8, 8], strides = [1, 1]} : vector<8x128xf32> to vector<8x8xf32>
    %81 = vector.extract_strided_slice %69 {offsets = [0, 16], sizes = [8, 8], strides = [1, 1]} : vector<8x128xf32> to vector<8x8xf32>
    %82 = vector.broadcast %2 : vector<1x8xf32> to vector<8x8xf32>
    %83 = arith.addf %81, %82 : vector<8x8xf32>
    %84 = arith.mulf %78, %83 : vector<8x8xf32>
    %85 = arith.addf %80, %84 : vector<8x8xf32>
    %86 = math.tanh %85 : vector<8x8xf32>
    %cst_11 = arith.constant 1.000000e+00 : f32
    %87 = vector.broadcast %cst_11 : f32 to vector<8x8xf32>
    %88 = arith.subf %87, %79 : vector<8x8xf32>
    %89 = arith.mulf %88, %86 : vector<8x8xf32>
    %90 = arith.mulf %79, %51 : vector<8x8xf32>
    %91 = arith.addf %89, %90 : vector<8x8xf32>
    %92 = vector.extract_strided_slice %10 {offsets = [16, 0], sizes = [8, 128], strides = [1, 1]} : vector<64x128xf32> to vector<8x128xf32>
    %93 = vector.extract_strided_slice %91 {offsets = [0, 0], sizes = [8, 1], strides = [1, 1]} : vector<8x8xf32> to vector<8x1xf32>
    %94 = vector.extract_strided_slice %0 {offsets = [0, 0], sizes = [1, 128], strides = [1, 1]} : vector<8x128xf32> to vector<1x128xf32>
    %95 = vector.broadcast %93 : vector<8x1xf32> to vector<8x128xf32>
    %96 = vector.broadcast %94 : vector<1x128xf32> to vector<8x128xf32>
    %97 = arith.mulf %95, %96 : vector<8x128xf32>
    %98 = vector.extract_strided_slice %91 {offsets = [0, 1], sizes = [8, 1], strides = [1, 1]} : vector<8x8xf32> to vector<8x1xf32>
    %99 = vector.extract_strided_slice %0 {offsets = [1, 0], sizes = [1, 128], strides = [1, 1]} : vector<8x128xf32> to vector<1x128xf32>
    %100 = vector.broadcast %98 : vector<8x1xf32> to vector<8x128xf32>
    %101 = vector.broadcast %99 : vector<1x128xf32> to vector<8x128xf32>
    %102 = arith.mulf %100, %101 : vector<8x128xf32>
    %103 = arith.addf %97, %102 : vector<8x128xf32>
    %104 = vector.extract_strided_slice %91 {offsets = [0, 2], sizes = [8, 1], strides = [1, 1]} : vector<8x8xf32> to vector<8x1xf32>
    %105 = vector.extract_strided_slice %0 {offsets = [2, 0], sizes = [1, 128], strides = [1, 1]} : vector<8x128xf32> to vector<1x128xf32>
    %106 = vector.broadcast %104 : vector<8x1xf32> to vector<8x128xf32>
    %107 = vector.broadcast %105 : vector<1x128xf32> to vector<8x128xf32>
    %108 = arith.mulf %106, %107 : vector<8x128xf32>
    %109 = arith.addf %103, %108 : vector<8x128xf32>
    %110 = vector.extract_strided_slice %92 {offsets = [0, 0], sizes = [8, 16], strides = [1, 1]} : vector<8x128xf32> to vector<8x16xf32>
    %111 = vector.extract_strided_slice %109 {offsets = [0, 0], sizes = [8, 16], strides = [1, 1]} : vector<8x128xf32> to vector<8x16xf32>
    %112 = arith.addf %110, %111 : vector<8x16xf32>
    %113 = arith.negf %112 : vector<8x16xf32>
    %114 = math.exp %113 : vector<8x16xf32>
    %cst_12 = arith.constant 1.000000e+00 : f32
    %115 = vector.broadcast %cst_12 : f32 to vector<8x16xf32>
    %116 = arith.addf %115, %114 : vector<8x16xf32>
    %117 = arith.divf %115, %116 : vector<8x16xf32>
    %118 = vector.extract_strided_slice %117 {offsets = [0, 0], sizes = [8, 8], strides = [1, 1]} : vector<8x16xf32> to vector<8x8xf32>
    %119 = vector.extract_strided_slice %117 {offsets = [0, 8], sizes = [8, 8], strides = [1, 1]} : vector<8x16xf32> to vector<8x8xf32>
    %120 = vector.extract_strided_slice %92 {offsets = [0, 16], sizes = [8, 8], strides = [1, 1]} : vector<8x128xf32> to vector<8x8xf32>
    %121 = vector.extract_strided_slice %109 {offsets = [0, 16], sizes = [8, 8], strides = [1, 1]} : vector<8x128xf32> to vector<8x8xf32>
    %122 = vector.broadcast %2 : vector<1x8xf32> to vector<8x8xf32>
    %123 = arith.addf %121, %122 : vector<8x8xf32>
    %124 = arith.mulf %118, %123 : vector<8x8xf32>
    %125 = arith.addf %120, %124 : vector<8x8xf32>
    %126 = math.tanh %125 : vector<8x8xf32>
    %cst_13 = arith.constant 1.000000e+00 : f32
    %127 = vector.broadcast %cst_13 : f32 to vector<8x8xf32>
    %128 = arith.subf %127, %119 : vector<8x8xf32>
    %129 = arith.mulf %128, %126 : vector<8x8xf32>
    %130 = arith.mulf %119, %91 : vector<8x8xf32>
    %131 = arith.addf %129, %130 : vector<8x8xf32>
    %132 = vector.extract_strided_slice %10 {offsets = [24, 0], sizes = [8, 128], strides = [1, 1]} : vector<64x128xf32> to vector<8x128xf32>
    %133 = vector.extract_strided_slice %131 {offsets = [0, 0], sizes = [8, 1], strides = [1, 1]} : vector<8x8xf32> to vector<8x1xf32>
    %134 = vector.extract_strided_slice %0 {offsets = [0, 0], sizes = [1, 128], strides = [1, 1]} : vector<8x128xf32> to vector<1x128xf32>
    %135 = vector.broadcast %133 : vector<8x1xf32> to vector<8x128xf32>
    %136 = vector.broadcast %134 : vector<1x128xf32> to vector<8x128xf32>
    %137 = arith.mulf %135, %136 : vector<8x128xf32>
    %138 = vector.extract_strided_slice %131 {offsets = [0, 1], sizes = [8, 1], strides = [1, 1]} : vector<8x8xf32> to vector<8x1xf32>
    %139 = vector.extract_strided_slice %0 {offsets = [1, 0], sizes = [1, 128], strides = [1, 1]} : vector<8x128xf32> to vector<1x128xf32>
    %140 = vector.broadcast %138 : vector<8x1xf32> to vector<8x128xf32>
    %141 = vector.broadcast %139 : vector<1x128xf32> to vector<8x128xf32>
    %142 = arith.mulf %140, %141 : vector<8x128xf32>
    %143 = arith.addf %137, %142 : vector<8x128xf32>
    %144 = vector.extract_strided_slice %131 {offsets = [0, 2], sizes = [8, 1], strides = [1, 1]} : vector<8x8xf32> to vector<8x1xf32>
    %145 = vector.extract_strided_slice %0 {offsets = [2, 0], sizes = [1, 128], strides = [1, 1]} : vector<8x128xf32> to vector<1x128xf32>
    %146 = vector.broadcast %144 : vector<8x1xf32> to vector<8x128xf32>
    %147 = vector.broadcast %145 : vector<1x128xf32> to vector<8x128xf32>
    %148 = arith.mulf %146, %147 : vector<8x128xf32>
    %149 = arith.addf %143, %148 : vector<8x128xf32>
    %150 = vector.extract_strided_slice %132 {offsets = [0, 0], sizes = [8, 16], strides = [1, 1]} : vector<8x128xf32> to vector<8x16xf32>
    %151 = vector.extract_strided_slice %149 {offsets = [0, 0], sizes = [8, 16], strides = [1, 1]} : vector<8x128xf32> to vector<8x16xf32>
    %152 = arith.addf %150, %151 : vector<8x16xf32>
    %153 = arith.negf %152 : vector<8x16xf32>
    %154 = math.exp %153 : vector<8x16xf32>
    %cst_14 = arith.constant 1.000000e+00 : f32
    %155 = vector.broadcast %cst_14 : f32 to vector<8x16xf32>
    %156 = arith.addf %155, %154 : vector<8x16xf32>
    %157 = arith.divf %155, %156 : vector<8x16xf32>
    %158 = vector.extract_strided_slice %157 {offsets = [0, 0], sizes = [8, 8], strides = [1, 1]} : vector<8x16xf32> to vector<8x8xf32>
    %159 = vector.extract_strided_slice %157 {offsets = [0, 8], sizes = [8, 8], strides = [1, 1]} : vector<8x16xf32> to vector<8x8xf32>
    %160 = vector.extract_strided_slice %132 {offsets = [0, 16], sizes = [8, 8], strides = [1, 1]} : vector<8x128xf32> to vector<8x8xf32>
    %161 = vector.extract_strided_slice %149 {offsets = [0, 16], sizes = [8, 8], strides = [1, 1]} : vector<8x128xf32> to vector<8x8xf32>
    %162 = vector.broadcast %2 : vector<1x8xf32> to vector<8x8xf32>
    %163 = arith.addf %161, %162 : vector<8x8xf32>
    %164 = arith.mulf %158, %163 : vector<8x8xf32>
    %165 = arith.addf %160, %164 : vector<8x8xf32>
    %166 = math.tanh %165 : vector<8x8xf32>
    %cst_15 = arith.constant 1.000000e+00 : f32
    %167 = vector.broadcast %cst_15 : f32 to vector<8x8xf32>
    %168 = arith.subf %167, %159 : vector<8x8xf32>
    %169 = arith.mulf %168, %166 : vector<8x8xf32>
    %170 = arith.mulf %159, %131 : vector<8x8xf32>
    %171 = arith.addf %169, %170 : vector<8x8xf32>
    %172 = vector.extract_strided_slice %10 {offsets = [32, 0], sizes = [8, 128], strides = [1, 1]} : vector<64x128xf32> to vector<8x128xf32>
    %173 = vector.extract_strided_slice %171 {offsets = [0, 0], sizes = [8, 1], strides = [1, 1]} : vector<8x8xf32> to vector<8x1xf32>
    %174 = vector.extract_strided_slice %0 {offsets = [0, 0], sizes = [1, 128], strides = [1, 1]} : vector<8x128xf32> to vector<1x128xf32>
    %175 = vector.broadcast %173 : vector<8x1xf32> to vector<8x128xf32>
    %176 = vector.broadcast %174 : vector<1x128xf32> to vector<8x128xf32>
    %177 = arith.mulf %175, %176 : vector<8x128xf32>
    %178 = vector.extract_strided_slice %171 {offsets = [0, 1], sizes = [8, 1], strides = [1, 1]} : vector<8x8xf32> to vector<8x1xf32>
    %179 = vector.extract_strided_slice %0 {offsets = [1, 0], sizes = [1, 128], strides = [1, 1]} : vector<8x128xf32> to vector<1x128xf32>
    %180 = vector.broadcast %178 : vector<8x1xf32> to vector<8x128xf32>
    %181 = vector.broadcast %179 : vector<1x128xf32> to vector<8x128xf32>
    %182 = arith.mulf %180, %181 : vector<8x128xf32>
    %183 = arith.addf %177, %182 : vector<8x128xf32>
    %184 = vector.extract_strided_slice %171 {offsets = [0, 2], sizes = [8, 1], strides = [1, 1]} : vector<8x8xf32> to vector<8x1xf32>
    %185 = vector.extract_strided_slice %0 {offsets = [2, 0], sizes = [1, 128], strides = [1, 1]} : vector<8x128xf32> to vector<1x128xf32>
    %186 = vector.broadcast %184 : vector<8x1xf32> to vector<8x128xf32>
    %187 = vector.broadcast %185 : vector<1x128xf32> to vector<8x128xf32>
    %188 = arith.mulf %186, %187 : vector<8x128xf32>
    %189 = arith.addf %183, %188 : vector<8x128xf32>
    %190 = vector.extract_strided_slice %172 {offsets = [0, 0], sizes = [8, 16], strides = [1, 1]} : vector<8x128xf32> to vector<8x16xf32>
    %191 = vector.extract_strided_slice %189 {offsets = [0, 0], sizes = [8, 16], strides = [1, 1]} : vector<8x128xf32> to vector<8x16xf32>
    %192 = arith.addf %190, %191 : vector<8x16xf32>
    %193 = arith.negf %192 : vector<8x16xf32>
    %194 = math.exp %193 : vector<8x16xf32>
    %cst_16 = arith.constant 1.000000e+00 : f32
    %195 = vector.broadcast %cst_16 : f32 to vector<8x16xf32>
    %196 = arith.addf %195, %194 : vector<8x16xf32>
    %197 = arith.divf %195, %196 : vector<8x16xf32>
    %198 = vector.extract_strided_slice %197 {offsets = [0, 0], sizes = [8, 8], strides = [1, 1]} : vector<8x16xf32> to vector<8x8xf32>
    %199 = vector.extract_strided_slice %197 {offsets = [0, 8], sizes = [8, 8], strides = [1, 1]} : vector<8x16xf32> to vector<8x8xf32>
    %200 = vector.extract_strided_slice %172 {offsets = [0, 16], sizes = [8, 8], strides = [1, 1]} : vector<8x128xf32> to vector<8x8xf32>
    %201 = vector.extract_strided_slice %189 {offsets = [0, 16], sizes = [8, 8], strides = [1, 1]} : vector<8x128xf32> to vector<8x8xf32>
    %202 = vector.broadcast %2 : vector<1x8xf32> to vector<8x8xf32>
    %203 = arith.addf %201, %202 : vector<8x8xf32>
    %204 = arith.mulf %198, %203 : vector<8x8xf32>
    %205 = arith.addf %200, %204 : vector<8x8xf32>
    %206 = math.tanh %205 : vector<8x8xf32>
    %cst_17 = arith.constant 1.000000e+00 : f32
    %207 = vector.broadcast %cst_17 : f32 to vector<8x8xf32>
    %208 = arith.subf %207, %199 : vector<8x8xf32>
    %209 = arith.mulf %208, %206 : vector<8x8xf32>
    %210 = arith.mulf %199, %171 : vector<8x8xf32>
    %211 = arith.addf %209, %210 : vector<8x8xf32>
    %212 = vector.extract_strided_slice %10 {offsets = [40, 0], sizes = [8, 128], strides = [1, 1]} : vector<64x128xf32> to vector<8x128xf32>
    %213 = vector.extract_strided_slice %211 {offsets = [0, 0], sizes = [8, 1], strides = [1, 1]} : vector<8x8xf32> to vector<8x1xf32>
    %214 = vector.extract_strided_slice %0 {offsets = [0, 0], sizes = [1, 128], strides = [1, 1]} : vector<8x128xf32> to vector<1x128xf32>
    %215 = vector.broadcast %213 : vector<8x1xf32> to vector<8x128xf32>
    %216 = vector.broadcast %214 : vector<1x128xf32> to vector<8x128xf32>
    %217 = arith.mulf %215, %216 : vector<8x128xf32>
    %218 = vector.extract_strided_slice %211 {offsets = [0, 1], sizes = [8, 1], strides = [1, 1]} : vector<8x8xf32> to vector<8x1xf32>
    %219 = vector.extract_strided_slice %0 {offsets = [1, 0], sizes = [1, 128], strides = [1, 1]} : vector<8x128xf32> to vector<1x128xf32>
    %220 = vector.broadcast %218 : vector<8x1xf32> to vector<8x128xf32>
    %221 = vector.broadcast %219 : vector<1x128xf32> to vector<8x128xf32>
    %222 = arith.mulf %220, %221 : vector<8x128xf32>
    %223 = arith.addf %217, %222 : vector<8x128xf32>
    %224 = vector.extract_strided_slice %211 {offsets = [0, 2], sizes = [8, 1], strides = [1, 1]} : vector<8x8xf32> to vector<8x1xf32>
    %225 = vector.extract_strided_slice %0 {offsets = [2, 0], sizes = [1, 128], strides = [1, 1]} : vector<8x128xf32> to vector<1x128xf32>
    %226 = vector.broadcast %224 : vector<8x1xf32> to vector<8x128xf32>
    %227 = vector.broadcast %225 : vector<1x128xf32> to vector<8x128xf32>
    %228 = arith.mulf %226, %227 : vector<8x128xf32>
    %229 = arith.addf %223, %228 : vector<8x128xf32>
    %230 = vector.extract_strided_slice %212 {offsets = [0, 0], sizes = [8, 16], strides = [1, 1]} : vector<8x128xf32> to vector<8x16xf32>
    %231 = vector.extract_strided_slice %229 {offsets = [0, 0], sizes = [8, 16], strides = [1, 1]} : vector<8x128xf32> to vector<8x16xf32>
    %232 = arith.addf %230, %231 : vector<8x16xf32>
    %233 = arith.negf %232 : vector<8x16xf32>
    %234 = math.exp %233 : vector<8x16xf32>
    %cst_18 = arith.constant 1.000000e+00 : f32
    %235 = vector.broadcast %cst_18 : f32 to vector<8x16xf32>
    %236 = arith.addf %235, %234 : vector<8x16xf32>
    %237 = arith.divf %235, %236 : vector<8x16xf32>
    %238 = vector.extract_strided_slice %237 {offsets = [0, 0], sizes = [8, 8], strides = [1, 1]} : vector<8x16xf32> to vector<8x8xf32>
    %239 = vector.extract_strided_slice %237 {offsets = [0, 8], sizes = [8, 8], strides = [1, 1]} : vector<8x16xf32> to vector<8x8xf32>
    %240 = vector.extract_strided_slice %212 {offsets = [0, 16], sizes = [8, 8], strides = [1, 1]} : vector<8x128xf32> to vector<8x8xf32>
    %241 = vector.extract_strided_slice %229 {offsets = [0, 16], sizes = [8, 8], strides = [1, 1]} : vector<8x128xf32> to vector<8x8xf32>
    %242 = vector.broadcast %2 : vector<1x8xf32> to vector<8x8xf32>
    %243 = arith.addf %241, %242 : vector<8x8xf32>
    %244 = arith.mulf %238, %243 : vector<8x8xf32>
    %245 = arith.addf %240, %244 : vector<8x8xf32>
    %246 = math.tanh %245 : vector<8x8xf32>
    %cst_19 = arith.constant 1.000000e+00 : f32
    %247 = vector.broadcast %cst_19 : f32 to vector<8x8xf32>
    %248 = arith.subf %247, %239 : vector<8x8xf32>
    %249 = arith.mulf %248, %246 : vector<8x8xf32>
    %250 = arith.mulf %239, %211 : vector<8x8xf32>
    %251 = arith.addf %249, %250 : vector<8x8xf32>
    %252 = vector.extract_strided_slice %10 {offsets = [48, 0], sizes = [8, 128], strides = [1, 1]} : vector<64x128xf32> to vector<8x128xf32>
    %253 = vector.extract_strided_slice %251 {offsets = [0, 0], sizes = [8, 1], strides = [1, 1]} : vector<8x8xf32> to vector<8x1xf32>
    %254 = vector.extract_strided_slice %0 {offsets = [0, 0], sizes = [1, 128], strides = [1, 1]} : vector<8x128xf32> to vector<1x128xf32>
    %255 = vector.broadcast %253 : vector<8x1xf32> to vector<8x128xf32>
    %256 = vector.broadcast %254 : vector<1x128xf32> to vector<8x128xf32>
    %257 = arith.mulf %255, %256 : vector<8x128xf32>
    %258 = vector.extract_strided_slice %251 {offsets = [0, 1], sizes = [8, 1], strides = [1, 1]} : vector<8x8xf32> to vector<8x1xf32>
    %259 = vector.extract_strided_slice %0 {offsets = [1, 0], sizes = [1, 128], strides = [1, 1]} : vector<8x128xf32> to vector<1x128xf32>
    %260 = vector.broadcast %258 : vector<8x1xf32> to vector<8x128xf32>
    %261 = vector.broadcast %259 : vector<1x128xf32> to vector<8x128xf32>
    %262 = arith.mulf %260, %261 : vector<8x128xf32>
    %263 = arith.addf %257, %262 : vector<8x128xf32>
    %264 = vector.extract_strided_slice %251 {offsets = [0, 2], sizes = [8, 1], strides = [1, 1]} : vector<8x8xf32> to vector<8x1xf32>
    %265 = vector.extract_strided_slice %0 {offsets = [2, 0], sizes = [1, 128], strides = [1, 1]} : vector<8x128xf32> to vector<1x128xf32>
    %266 = vector.broadcast %264 : vector<8x1xf32> to vector<8x128xf32>
    %267 = vector.broadcast %265 : vector<1x128xf32> to vector<8x128xf32>
    %268 = arith.mulf %266, %267 : vector<8x128xf32>
    %269 = arith.addf %263, %268 : vector<8x128xf32>
    %270 = vector.extract_strided_slice %252 {offsets = [0, 0], sizes = [8, 16], strides = [1, 1]} : vector<8x128xf32> to vector<8x16xf32>
    %271 = vector.extract_strided_slice %269 {offsets = [0, 0], sizes = [8, 16], strides = [1, 1]} : vector<8x128xf32> to vector<8x16xf32>
    %272 = arith.addf %270, %271 : vector<8x16xf32>
    %273 = arith.negf %272 : vector<8x16xf32>
    %274 = math.exp %273 : vector<8x16xf32>
    %cst_20 = arith.constant 1.000000e+00 : f32
    %275 = vector.broadcast %cst_20 : f32 to vector<8x16xf32>
    %276 = arith.addf %275, %274 : vector<8x16xf32>
    %277 = arith.divf %275, %276 : vector<8x16xf32>
    %278 = vector.extract_strided_slice %277 {offsets = [0, 0], sizes = [8, 8], strides = [1, 1]} : vector<8x16xf32> to vector<8x8xf32>
    %279 = vector.extract_strided_slice %277 {offsets = [0, 8], sizes = [8, 8], strides = [1, 1]} : vector<8x16xf32> to vector<8x8xf32>
    %280 = vector.extract_strided_slice %252 {offsets = [0, 16], sizes = [8, 8], strides = [1, 1]} : vector<8x128xf32> to vector<8x8xf32>
    %281 = vector.extract_strided_slice %269 {offsets = [0, 16], sizes = [8, 8], strides = [1, 1]} : vector<8x128xf32> to vector<8x8xf32>
    %282 = vector.broadcast %2 : vector<1x8xf32> to vector<8x8xf32>
    %283 = arith.addf %281, %282 : vector<8x8xf32>
    %284 = arith.mulf %278, %283 : vector<8x8xf32>
    %285 = arith.addf %280, %284 : vector<8x8xf32>
    %286 = math.tanh %285 : vector<8x8xf32>
    %cst_21 = arith.constant 1.000000e+00 : f32
    %287 = vector.broadcast %cst_21 : f32 to vector<8x8xf32>
    %288 = arith.subf %287, %279 : vector<8x8xf32>
    %289 = arith.mulf %288, %286 : vector<8x8xf32>
    %290 = arith.mulf %279, %251 : vector<8x8xf32>
    %291 = arith.addf %289, %290 : vector<8x8xf32>
    %292 = vector.extract_strided_slice %10 {offsets = [56, 0], sizes = [8, 128], strides = [1, 1]} : vector<64x128xf32> to vector<8x128xf32>
    %293 = vector.extract_strided_slice %291 {offsets = [0, 0], sizes = [8, 1], strides = [1, 1]} : vector<8x8xf32> to vector<8x1xf32>
    %294 = vector.extract_strided_slice %0 {offsets = [0, 0], sizes = [1, 128], strides = [1, 1]} : vector<8x128xf32> to vector<1x128xf32>
    %295 = vector.broadcast %293 : vector<8x1xf32> to vector<8x128xf32>
    %296 = vector.broadcast %294 : vector<1x128xf32> to vector<8x128xf32>
    %297 = arith.mulf %295, %296 : vector<8x128xf32>
    %298 = vector.extract_strided_slice %291 {offsets = [0, 1], sizes = [8, 1], strides = [1, 1]} : vector<8x8xf32> to vector<8x1xf32>
    %299 = vector.extract_strided_slice %0 {offsets = [1, 0], sizes = [1, 128], strides = [1, 1]} : vector<8x128xf32> to vector<1x128xf32>
    %300 = vector.broadcast %298 : vector<8x1xf32> to vector<8x128xf32>
    %301 = vector.broadcast %299 : vector<1x128xf32> to vector<8x128xf32>
    %302 = arith.mulf %300, %301 : vector<8x128xf32>
    %303 = arith.addf %297, %302 : vector<8x128xf32>
    %304 = vector.extract_strided_slice %291 {offsets = [0, 2], sizes = [8, 1], strides = [1, 1]} : vector<8x8xf32> to vector<8x1xf32>
    %305 = vector.extract_strided_slice %0 {offsets = [2, 0], sizes = [1, 128], strides = [1, 1]} : vector<8x128xf32> to vector<1x128xf32>
    %306 = vector.broadcast %304 : vector<8x1xf32> to vector<8x128xf32>
    %307 = vector.broadcast %305 : vector<1x128xf32> to vector<8x128xf32>
    %308 = arith.mulf %306, %307 : vector<8x128xf32>
    %309 = arith.addf %303, %308 : vector<8x128xf32>
    %310 = vector.extract_strided_slice %292 {offsets = [0, 0], sizes = [8, 16], strides = [1, 1]} : vector<8x128xf32> to vector<8x16xf32>
    %311 = vector.extract_strided_slice %309 {offsets = [0, 0], sizes = [8, 16], strides = [1, 1]} : vector<8x128xf32> to vector<8x16xf32>
    %312 = arith.addf %310, %311 : vector<8x16xf32>
    %313 = arith.negf %312 : vector<8x16xf32>
    %314 = math.exp %313 : vector<8x16xf32>
    %cst_22 = arith.constant 1.000000e+00 : f32
    %315 = vector.broadcast %cst_22 : f32 to vector<8x16xf32>
    %316 = arith.addf %315, %314 : vector<8x16xf32>
    %317 = arith.divf %315, %316 : vector<8x16xf32>
    %318 = vector.extract_strided_slice %317 {offsets = [0, 0], sizes = [8, 8], strides = [1, 1]} : vector<8x16xf32> to vector<8x8xf32>
    %319 = vector.extract_strided_slice %317 {offsets = [0, 8], sizes = [8, 8], strides = [1, 1]} : vector<8x16xf32> to vector<8x8xf32>
    %320 = vector.extract_strided_slice %292 {offsets = [0, 16], sizes = [8, 8], strides = [1, 1]} : vector<8x128xf32> to vector<8x8xf32>
    %321 = vector.extract_strided_slice %309 {offsets = [0, 16], sizes = [8, 8], strides = [1, 1]} : vector<8x128xf32> to vector<8x8xf32>
    %322 = vector.broadcast %2 : vector<1x8xf32> to vector<8x8xf32>
    %323 = arith.addf %321, %322 : vector<8x8xf32>
    %324 = arith.mulf %318, %323 : vector<8x8xf32>
    %325 = arith.addf %320, %324 : vector<8x8xf32>
    %326 = math.tanh %325 : vector<8x8xf32>
    %cst_23 = arith.constant 1.000000e+00 : f32
    %327 = vector.broadcast %cst_23 : f32 to vector<8x8xf32>
    %328 = arith.subf %327, %319 : vector<8x8xf32>
    %329 = arith.mulf %328, %326 : vector<8x8xf32>
    %330 = arith.mulf %319, %291 : vector<8x8xf32>
    %331 = arith.addf %329, %330 : vector<8x8xf32>
    %c0_24 = arith.constant 0 : index
    %c0_25 = arith.constant 0 : index
    %332 = vector.load %arg2[%c0_24, %c0_25] : memref<8x18xf32, #tpu.memory_space<vmem>>, vector<8x18xf32>
    %c0_26 = arith.constant 0 : index
    %c0_27 = arith.constant 0 : index
    %333 = vector.load %arg5[%c0_26, %c0_27] : memref<18x128xf32, #tpu.memory_space<vmem>>, vector<18x128xf32>
    %cst_28 = arith.constant dense<0.000000e+00> : vector<8x128xf32>
    %334 = tpu.matmul %332, %333, %cst_28 {dimension_numbers = #tpu.dot_dimension_numbers<[1], [0], [0], [1], [0, 0, 1, 1], [], []>} : vector<8x18xf32>, vector<18x128xf32>, vector<8x128xf32> -> vector<8x128xf32>
    %c0_29 = arith.constant 0 : index
    %c0_30 = arith.constant 0 : index
    %335 = vector.load %arg6[%c0_29, %c0_30] : memref<8x128xf32, #tpu.memory_space<vmem>>, vector<8x128xf32>
    %cst_31 = arith.constant dense<0.000000e+00> : vector<8x128xf32>
    %336 = tpu.matmul %331, %335, %cst_31 {dimension_numbers = #tpu.dot_dimension_numbers<[1], [0], [0], [1], [0, 0, 1, 1], [], []>} : vector<8x8xf32>, vector<8x128xf32>, vector<8x128xf32> -> vector<8x128xf32>
    %337 = arith.addf %334, %336 : vector<8x128xf32>
    %cst_32 = arith.constant 0.000000e+00 : f32
    %338 = vector.broadcast %cst_32 : f32 to vector<8x128xf32>
    %339 = arith.maximumf %337, %338 : vector<8x128xf32>
    %c0_33 = arith.constant 0 : index
    %c0_34 = arith.constant 0 : index
    %340 = vector.load %arg7[%c0_33, %c0_34] : memref<128x64xf32, #tpu.memory_space<vmem>>, vector<128x64xf32>
    %cst_35 = arith.constant dense<0.000000e+00> : vector<8x64xf32>
    %341 = tpu.matmul %339, %340, %cst_35 {dimension_numbers = #tpu.dot_dimension_numbers<[1], [0], [0], [1], [0, 0, 1, 1], [], []>} : vector<8x128xf32>, vector<128x64xf32>, vector<8x64xf32> -> vector<8x64xf32>
    %342 = vector.broadcast %3 : vector<1x64xf32> to vector<8x64xf32>
    %343 = arith.addf %341, %342 : vector<8x64xf32>
    %cst_36 = arith.constant 0.000000e+00 : f32
    %344 = vector.broadcast %cst_36 : f32 to vector<8x64xf32>
    %345 = arith.maximumf %343, %344 : vector<8x64xf32>
    %c0_37 = arith.constant 0 : index
    %c0_38 = arith.constant 0 : index
    %346 = vector.load %arg8[%c0_37, %c0_38] : memref<64x128xf32, #tpu.memory_space<vmem>>, vector<64x128xf32>
    %cst_39 = arith.constant dense<0.000000e+00> : vector<8x128xf32>
    %347 = tpu.matmul %345, %346, %cst_39 {dimension_numbers = #tpu.dot_dimension_numbers<[1], [0], [0], [1], [0, 0, 1, 1], [], []>} : vector<8x64xf32>, vector<64x128xf32>, vector<8x128xf32> -> vector<8x128xf32>
    %348 = vector.broadcast %4 : vector<1x128xf32> to vector<8x128xf32>
    %349 = arith.addf %347, %348 : vector<8x128xf32>
    %c0_40 = arith.constant 0 : index
    %c0_41 = arith.constant 0 : index
    %350 = vector.load %arg10[%c0_40, %c0_41] : memref<8x128xf32, #tpu.memory_space<vmem>>, vector<8x128xf32>
    tpu.vector_store %arg10[%c0_40, %c0_41], %349 {strides = array<i32>} : memref<8x128xf32, #tpu.memory_space<vmem>>, vector<8x128xf32>,
    return
  }
  func.func @transform_0(%arg0: i32) -> (i32, i32) {
    %c0_i32 = arith.constant 0 : i32
    %c0_i32_0 = arith.constant 0 : i32
    %c0_i32_1 = arith.constant 0 : i32
    return %c0_i32, %c0_i32_0 : i32, i32
  }
  func.func @transform_1(%arg0: i32) -> (i32, i32) {
    %c0_i32 = arith.constant 0 : i32
    %c0_i32_0 = arith.constant 0 : i32
    %c0_i32_1 = arith.constant 0 : i32
    return %c0_i32, %c0_i32_0 : i32, i32
  }
  func.func @transform_2(%arg0: i32) -> (i32, i32) {
    %c0_i32 = arith.constant 0 : i32
    %c0_i32_0 = arith.constant 0 : i32
    %c0_i32_1 = arith.constant 0 : i32
    return %c0_i32, %c0_i32_0 : i32, i32
  }
  func.func @transform_3(%arg0: i32) -> (i32, i32) {
    %c0_i32 = arith.constant 0 : i32
    %c0_i32_0 = arith.constant 0 : i32
    %c0_i32_1 = arith.constant 0 : i32
    return %c0_i32, %c0_i32_0 : i32, i32
  }
  func.func @transform_4(%arg0: i32) -> (i32, i32) {
    %c0_i32 = arith.constant 0 : i32
    %c0_i32_0 = arith.constant 0 : i32
    %c0_i32_1 = arith.constant 0 : i32
    return %c0_i32, %c0_i32_0 : i32, i32
  }
  func.func @transform_5(%arg0: i32) -> (i32, i32) {
    %c0_i32 = arith.constant 0 : i32
    %c0_i32_0 = arith.constant 0 : i32
    %c0_i32_1 = arith.constant 0 : i32
    return %c0_i32, %c0_i32_0 : i32, i32
  }
  func.func @transform_6(%arg0: i32) -> (i32, i32) {
    %c0_i32 = arith.constant 0 : i32
    %c0_i32_0 = arith.constant 0 : i32
    %c0_i32_1 = arith.constant 0 : i32
    return %c0_i32, %c0_i32_0 : i32, i32
  }
  func.func @transform_7(%arg0: i32) -> (i32, i32) {
    %c0_i32 = arith.constant 0 : i32
    %c0_i32_0 = arith.constant 0 : i32
    %c0_i32_1 = arith.constant 0 : i32
    return %c0_i32, %c0_i32_0 : i32, i32
  }
  func.func @transform_8(%arg0: i32) -> (i32, i32) {
    %c0_i32 = arith.constant 0 : i32
    %c0_i32_0 = arith.constant 0 : i32
    %c0_i32_1 = arith.constant 0 : i32
    return %c0_i32, %c0_i32_0 : i32, i32
  }
  func.func @transform_9(%arg0: i32) -> (i32, i32) {
    %c0_i32 = arith.constant 0 : i32
    %c0_i32_0 = arith.constant 0 : i32
    %c0_i32_1 = arith.constant 0 : i32
    return %c0_i32, %c0_i32_0 : i32, i32
  }
}

</mosaic_0001>

<llo_original>
// kernel: dqn_pallas.1
$region0: #{dqn_pallas.1}
  #allocation0 [shape = 'u32[]', space=smem, size = 0x4, offset = 0x4, fixed_abs, tag = 'smem constant byte address 0x4 - core index']
  #allocation1 [shape = 'u32[144,128]{1,0:T(1,128)}', space=vmem, size = 0x12000, scoped, tag = 'internal scratch']
  %s0 = inlined_call_operand.vmem [shape: f32[64,8], index: 0, kind: input, shape index: {}]
  %s1 = inlined_call_operand.vmem [shape: f32[8,18], index: 1, kind: input, shape index: {}]
  %s2 = inlined_call_operand.vmem [shape: f32[8,128], index: 2, kind: input, shape index: {}]
  %s3 = inlined_call_operand.vmem [shape: f32[8,128], index: 3, kind: input, shape index: {}]
  %s4 = inlined_call_operand.vmem [shape: f32[18,128], index: 4, kind: input, shape index: {}]
  %s5 = inlined_call_operand.vmem [shape: f32[8,128], index: 5, kind: input, shape index: {}]
  %s6 = inlined_call_operand.vmem [shape: f32[128,64], index: 6, kind: input, shape index: {}]
  %s7 = inlined_call_operand.vmem [shape: f32[64,128], index: 7, kind: input, shape index: {}]
  %s8 = inlined_call_operand.vmem [shape: f32[4,128], index: 8, kind: input, shape index: {}]
  %s9 = inlined_call_operand.vmem [shape: f32[8,128], index: 9, kind: output, shape index: {}]
  %s10 = sld [smem:[#allocation0]]
  $region46: #{dqn_pallas.1} parent=0
    _
  %s12 = ssub.s32 1, %s10
  %s13 = scalar_select 0, %s12, %s10
  // Predicated region
  $region2: #{dqn_pallas.1} parent=0 // pred_check
    _
  $region3: #{dqn_pallas.1} parent=0 // pred_check_branch
    %15 = sbr.rel (0) target = $region5
  $region4: #{dqn_pallas.1} parent=0 // pred_region
    _
  $region5: #{dqn_pallas.1} parent=0 // pred_fallthru
    _
  // Predicated region
  $region6: #{dqn_pallas.1} parent=0 // pred_check
    _
  $region7: #{dqn_pallas.1} parent=0 // pred_check_branch
    %17 = sbr.rel (0) target = $region9
  $region8: #{dqn_pallas.1} parent=0 // pred_region
    _
  $region9: #{dqn_pallas.1} parent=0 // pred_fallthru
    _
  // Predicated region
  $region10: #{dqn_pallas.1} parent=0 // pred_check
    _
  $region11: #{dqn_pallas.1} parent=0 // pred_check_branch
    %19 = sbr.rel (0) target = $region13
  $region12: #{dqn_pallas.1} parent=0 // pred_region
    _
  $region13: #{dqn_pallas.1} parent=0 // pred_fallthru
    _
  // Predicated region
  $region14: #{dqn_pallas.1} parent=0 // pred_check
    _
  $region15: #{dqn_pallas.1} parent=0 // pred_check_branch
    %21 = sbr.rel (0) target = $region17
  $region16: #{dqn_pallas.1} parent=0 // pred_region
    _
  $region17: #{dqn_pallas.1} parent=0 // pred_fallthru
    _
  // Predicated region
  $region18: #{dqn_pallas.1} parent=0 // pred_check
    _
  $region19: #{dqn_pallas.1} parent=0 // pred_check_branch
    %23 = sbr.rel (0) target = $region21
  $region20: #{dqn_pallas.1} parent=0 // pred_region
    _
  $region21: #{dqn_pallas.1} parent=0 // pred_fallthru
    _
  // Predicated region
  $region22: #{dqn_pallas.1} parent=0 // pred_check
    _
  $region23: #{dqn_pallas.1} parent=0 // pred_check_branch
    %25 = sbr.rel (0) target = $region25
  $region24: #{dqn_pallas.1} parent=0 // pred_region
    _
  $region25: #{dqn_pallas.1} parent=0 // pred_fallthru
    _
  // Predicated region
  $region26: #{dqn_pallas.1} parent=0 // pred_check
    _
  $region27: #{dqn_pallas.1} parent=0 // pred_check_branch
    %27 = sbr.rel (0) target = $region29
  $region28: #{dqn_pallas.1} parent=0 // pred_region
    _
  $region29: #{dqn_pallas.1} parent=0 // pred_fallthru
    _
  // Predicated region
  $region30: #{dqn_pallas.1} parent=0 // pred_check
    _
  $region31: #{dqn_pallas.1} parent=0 // pred_check_branch
    %29 = sbr.rel (0) target = $region33
  $region32: #{dqn_pallas.1} parent=0 // pred_region
    _
  $region33: #{dqn_pallas.1} parent=0 // pred_fallthru
    _
  // Predicated region
  $region34: #{dqn_pallas.1} parent=0 // pred_check
    _
  $region35: #{dqn_pallas.1} parent=0 // pred_check_branch
    %31 = sbr.rel (0) target = $region37
  $region36: #{dqn_pallas.1} parent=0 // pred_region
    _
  $region37: #{dqn_pallas.1} parent=0 // pred_fallthru
    _
  %v32 = vld [vmem:[%s3] sm:$0xff]
  %v33 = vld [vmem:[%s8] sm:$0xf]
  %v34 = vld [vmem:[%s0] sm:$0xff]
  %v35 = vld [vmem:[%s0 + $0x8] sm:$0xff]
  %v36 = vld [vmem:[%s0 + $0x10] sm:$0xff]
  %v37 = vld [vmem:[%s0 + $0x18] sm:$0xff]
  %v38 = vld [vmem:[%s0 + $0x20] sm:$0xff]
  %v39 = vld [vmem:[%s0 + $0x28] sm:$0xff]
  %v40 = vld [vmem:[%s0 + $0x30] sm:$0xff]
  %v41 = vld [vmem:[%s0 + $0x38] sm:$0xff]
  %v42 = vld [vmem:[%s2] sm:$0xff]
  %v43 = vlaneseq
  %v44 = vshrl.u32 %v43, 7
  %v45 = vsub.s32 0, %v44
  %v46 = vrot.slane %v33, %v45
  %vm47 = vcmask 64512
  %v49 = vsel %vm47, %v34, 0
  %v52 = vsel %vm47, %v35, 0
  %v55 = vsel %vm47, %v36, 0
  %v58 = vsel %vm47, %v37, 0
  %v61 = vsel %vm47, %v38, 0
  %v64 = vsel %vm47, %v39, 0
  %v67 = vsel %vm47, %v40, 0
  %v70 = vsel %vm47, %v41, 0
  %72 = vmatprep.subr.mxu0 0.0
  %73 = vmatpush1.msra.mxu0 0.0
  %74 = vmatprep.subr.mxu0 0.0
  %75 = vmatpush1.msra.mxu0 0.0
  %76 = vmatprep.subr.mxu0 0.0
  %77 = vmatpush1.msra.mxu0 0.0
  %78 = vmatprep.subr.mxu0 0.0
  %79 = vmatpush1.msra.mxu0 0.0
  %80 = vmatprep.subr.mxu0 0.0
  %81 = vmatpush1.msra.mxu0 0.0
  %82 = vmatprep.subr.mxu0 0.0
  %83 = vmatpush1.msra.mxu0 0.0
  %84 = vmatprep.subr.mxu0 0.0
  %85 = vmatpush1.msra.mxu0 0.0
  %86 = vmatprep.subr.mxu0 0.0
  %87 = vmatpush1.msra.mxu0 0.0
  %88 = vmatprep.subr.mxu0 0.0
  %89 = vmatpush1.msra.mxu0 0.0
  %90 = vmatprep.subr.mxu0 0.0
  %91 = vmatpush1.msra.mxu0 0.0
  %92 = vmatprep.subr.mxu0 0.0
  %93 = vmatpush1.msra.mxu0 0.0
  %94 = vmatprep.subr.mxu0 0.0
  %95 = vmatpush1.msra.mxu0 0.0
  %96 = vmatprep.subr.mxu0 0.0
  %97 = vmatpush1.msra.mxu0 0.0
  %98 = vmatprep.subr.mxu0 0.0
  %99 = vmatpush1.msra.mxu0 0.0
  %100 = vmatprep.subr.mxu0 0.0
  %101 = vmatpush1.msra.mxu0 0.0
  %102 = vmatprep.subr.mxu0 0.0
  %103 = vmatpush1.msra.mxu0 %v42
  %104 = vmatprep.subr.mxu0 0.0
  %105 = vmatpush2.msra.mxu0 0.0
  %106 = vmatprep.subr.mxu0 0.0
  %107 = vmatpush2.msra.mxu0 0.0
  %108 = vmatprep.subr.mxu0 0.0
  %109 = vmatpush2.msra.mxu0 0.0
  %110 = vmatprep.subr.mxu0 0.0
  %111 = vmatpush2.msra.mxu0 0.0
  %112 = vmatprep.subr.mxu0 0.0
  %113 = vmatpush2.msra.mxu0 0.0
  %114 = vmatprep.subr.mxu0 0.0
  %115 = vmatpush2.msra.mxu0 0.0
  %116 = vmatprep.subr.mxu0 0.0
  %117 = vmatpush2.msra.mxu0 0.0
  %118 = vmatprep.subr.mxu0 0.0
  %119 = vmatpush2.msra.mxu0 0.0
  %120 = vmatprep.subr.mxu0 0.0
  %121 = vmatpush2.msra.mxu0 0.0
  %122 = vmatprep.subr.mxu0 0.0
  %123 = vmatpush2.msra.mxu0 0.0
  %124 = vmatprep.subr.mxu0 0.0
  %125 = vmatpush2.msra.mxu0 0.0
  %126 = vmatprep.subr.mxu0 0.0
  %127 = vmatpush2.msra.mxu0 0.0
  %128 = vmatprep.subr.mxu0 0.0
  %129 = vmatpush2.msra.mxu0 0.0
  %130 = vmatprep.subr.mxu0 0.0
  %131 = vmatpush2.msra.mxu0 0.0
  %132 = vmatprep.subr.mxu0 0.0
  %133 = vmatpush2.msra.mxu0 0.0
  %134 = vmatprep.subr.mxu0 0.0
  %135 = vmatpush2.msra.mxu0 0.0
  %136 = vmatprep.mubr.f32.mxu0 0.0
  %137 = vmatmul.mubr.f32.gmra.mxu0 %v49
  %v138 = vpop.f32.mrf.mxu0
  %v139 = vadd.f32 %v46, %v138
  %v140 = vpop.f32.mrf.mxu0
  %141 = vmatprep.mubr.f32.mxu0 0.0
  %142 = vmatmul.mubr.f32.gmra.mxu0 %v52
  %v143 = vpop.f32.mrf.mxu0
  %v144 = vadd.f32 %v46, %v143
  %v145 = vpop.f32.mrf.mxu0
  %146 = vmatprep.mubr.f32.mxu0 0.0
  %147 = vmatmul.mubr.f32.gmra.mxu0 %v55
  %v148 = vpop.f32.mrf.mxu0
  %v149 = vadd.f32 %v46, %v148
  %v150 = vpop.f32.mrf.mxu0
  %151 = vmatprep.mubr.f32.mxu0 0.0
  %152 = vmatmul.mubr.f32.gmra.mxu0 %v58
  %v153 = vpop.f32.mrf.mxu0
  %v154 = vadd.f32 %v46, %v153
  %v155 = vpop.f32.mrf.mxu0
  %156 = vmatprep.mubr.f32.mxu0 0.0
  %157 = vmatmul.mubr.f32.gmra.mxu0 %v61
  %v158 = vpop.f32.mrf.mxu0
  %v159 = vadd.f32 %v46, %v158
  %v160 = vpop.f32.mrf.mxu0
  %161 = vmatprep.mubr.f32.mxu0 0.0
  %162 = vmatmul.mubr.f32.gmra.mxu0 %v64
  %v163 = vpop.f32.mrf.mxu0
  %v164 = vadd.f32 %v46, %v163
  %v165 = vpop.f32.mrf.mxu0
  %166 = vmatprep.mubr.f32.mxu0 0.0
  %167 = vmatmul.mubr.f32.gmra.mxu0 %v67
  %v168 = vpop.f32.mrf.mxu0
  %v169 = vadd.f32 %v46, %v168
  %v170 = vpop.f32.mrf.mxu0
  %171 = vmatprep.mubr.f32.mxu0 0.0
  %172 = vmatmul.mubr.f32.gmra.mxu0 %v70
  %v173 = vpop.f32.mrf.mxu0
  %v174 = vadd.f32 %v46, %v173
  %v175 = vpop.f32.mrf.mxu0
  %176 = vdwg.mxu0
  %v177 = vlaneseq
  %v178 = vshrl.u32 %v177, 7
  %v179 = vsub.s32 0, %v178
  %v180 = vrot.slane %v32, %v179
  %v181 = vmul.f32 %v180, 0.0
  %v182 = vlaneseq
  %v183 = vshrl.u32 %v182, 7
  %v184 = vsub.s32 1, %v183
  %v185 = vrot.slane %v32, %v184
  %v186 = vmul.f32 %v185, 0.0
  %v187 = vadd.f32 %v181, %v186
  %v188 = vlaneseq
  %v189 = vshrl.u32 %v188, 7
  %v190 = vsub.s32 2, %v189
  %v191 = vrot.slane %v32, %v190
  %v192 = vmul.f32 %v191, 0.0
  %v193 = vadd.f32 %v187, %v192
  %v194 = vadd.f32 %v139, %v193
  %v195 = vxor.u32 %v194, 2147483648
  %v196 = vmul.f32 %v195, 1.442695
  %v197 = vpow.pop %v196
  %v198 = vadd.f32 %v197, 1.0
  %v199 = vrcp.pop %v198
  %v200 = vmul.f32 1.0, %v199
  %v201 = vlaneseq
  %v202 = vshrl.u32 %v201, 7
  %v203 = vsub.s32 1, %v202
  %v204 = vrot.slane %v33, %v203
  %206 = vrot.lane.b32.xlu0 %v204, 16
  %v207 = vpop.permute.xlu0 %206
  %v209 = vadd.f32 %v193, %v207
  %211 = vrot.lane.b32.xlu0 %v209, 112
  %v212 = vpop.permute.xlu0 %211
  %v214 = vmul.f32 %v200, %v212
  %216 = vrot.lane.b32.xlu0 %v214, 16
  %v217 = vpop.permute.xlu0 %216
  %v219 = vadd.f32 %v139, %v217
  %v220 = vtanh.pop %v219
  %v221 = vsub.f32 1.0, %v200
  %223 = vrot.lane.b32.xlu0 %v220, 120
  %v224 = vpop.permute.xlu0 %223
  %v226 = vmul.f32 %v221, %v224
  %v227 = vmul.f32 %v200, 0.0
  %v228 = vadd.f32 %v226, %v227
  %230 = vset.pattern.permute.xlu0 8
  %231 = vperm.xlu0 %230, %v228
  %v232 = vpop.permute.xlu0 %231
  %v234 = vmul.f32 %v232, %v180
  %235 = vset.pattern.permute.xlu0 9
  %236 = vperm.xlu0 %235, %v228
  %v237 = vpop.permute.xlu0 %236
  %v239 = vmul.f32 %v237, %v185
  %v240 = vadd.f32 %v234, %v239
  %241 = vset.pattern.permute.xlu0 10
  %242 = vperm.xlu0 %241, %v228
  %v243 = vpop.permute.xlu0 %242
  %v245 = vmul.f32 %v243, %v191
  %v246 = vadd.f32 %v240, %v245
  %v247 = vadd.f32 %v144, %v246
  %v248 = vxor.u32 %v247, 2147483648
  %v249 = vmul.f32 %v248, 1.442695
  %v250 = vpow.pop %v249
  %v251 = vadd.f32 %v250, 1.0
  %v252 = vrcp.pop %v251
  %v253 = vmul.f32 1.0, %v252
  %v254 = vadd.f32 %v246, %v207
  %256 = vrot.lane.b32.xlu0 %v254, 112
  %v257 = vpop.permute.xlu0 %256
  %v259 = vmul.f32 %v253, %v257
  %261 = vrot.lane.b32.xlu0 %v259, 16
  %v262 = vpop.permute.xlu0 %261
  %v264 = vadd.f32 %v144, %v262
  %v265 = vtanh.pop %v264
  %v266 = vsub.f32 1.0, %v253
  %268 = vrot.lane.b32.xlu0 %v265, 120
  %v269 = vpop.permute.xlu0 %268
  %v271 = vmul.f32 %v266, %v269
  %v272 = vmul.f32 %v253, %v228
  %v273 = vadd.f32 %v271, %v272
  %275 = vset.pattern.permute.xlu0 8
  %276 = vperm.xlu0 %275, %v273
  %v277 = vpop.permute.xlu0 %276
  %v279 = vmul.f32 %v277, %v180
  %280 = vset.pattern.permute.xlu0 9
  %281 = vperm.xlu0 %280, %v273
  %v282 = vpop.permute.xlu0 %281
  %v284 = vmul.f32 %v282, %v185
  %v285 = vadd.f32 %v279, %v284
  %286 = vset.pattern.permute.xlu0 10
  %287 = vperm.xlu0 %286, %v273
  %v288 = vpop.permute.xlu0 %287
  %v290 = vmul.f32 %v288, %v191
  %v291 = vadd.f32 %v285, %v290
  %v292 = vadd.f32 %v149, %v291
  %v293 = vxor.u32 %v292, 2147483648
  %v294 = vmul.f32 %v293, 1.442695
  %v295 = vpow.pop %v294
  %v296 = vadd.f32 %v295, 1.0
  %v297 = vrcp.pop %v296
  %v298 = vmul.f32 1.0, %v297
  %v299 = vadd.f32 %v291, %v207
  %301 = vrot.lane.b32.xlu0 %v299, 112
  %v302 = vpop.permute.xlu0 %301
  %v304 = vmul.f32 %v298, %v302
  %306 = vrot.lane.b32.xlu0 %v304, 16
  %v307 = vpop.permute.xlu0 %306
  %v309 = vadd.f32 %v149, %v307
  %v310 = vtanh.pop %v309
  %v311 = vsub.f32 1.0, %v298
  %313 = vrot.lane.b32.xlu0 %v310, 120
  %v314 = vpop.permute.xlu0 %313
  %v316 = vmul.f32 %v311, %v314
  %v317 = vmul.f32 %v298, %v273
  %v318 = vadd.f32 %v316, %v317
  %320 = vset.pattern.permute.xlu0 8
  %321 = vperm.xlu0 %320, %v318
  %v322 = vpop.permute.xlu0 %321
  %v324 = vmul.f32 %v322, %v180
  %325 = vset.pattern.permute.xlu0 9
  %326 = vperm.xlu0 %325, %v318
  %v327 = vpop.permute.xlu0 %326
  %v329 = vmul.f32 %v327, %v185
  %v330 = vadd.f32 %v324, %v329
  %331 = vset.pattern.permute.xlu0 10
  %332 = vperm.xlu0 %331, %v318
  %v333 = vpop.permute.xlu0 %332
  %v335 = vmul.f32 %v333, %v191
  %v336 = vadd.f32 %v330, %v335
  %v337 = vadd.f32 %v154, %v336
  %v338 = vxor.u32 %v337, 2147483648
  %v339 = vmul.f32 %v338, 1.442695
  %v340 = vpow.pop %v339
  %v341 = vadd.f32 %v340, 1.0
  %v342 = vrcp.pop %v341
  %v343 = vmul.f32 1.0, %v342
  %v344 = vadd.f32 %v336, %v207
  %346 = vrot.lane.b32.xlu0 %v344, 112
  %v347 = vpop.permute.xlu0 %346
  %v349 = vmul.f32 %v343, %v347
  %351 = vrot.lane.b32.xlu0 %v349, 16
  %v352 = vpop.permute.xlu0 %351
  %v354 = vadd.f32 %v154, %v352
  %v355 = vtanh.pop %v354
  %v356 = vsub.f32 1.0, %v343
  %358 = vrot.lane.b32.xlu0 %v355, 120
  %v359 = vpop.permute.xlu0 %358
  %v361 = vmul.f32 %v356, %v359
  %v362 = vmul.f32 %v343, %v318
  %v363 = vadd.f32 %v361, %v362
  %365 = vset.pattern.permute.xlu0 8
  %366 = vperm.xlu0 %365, %v363
  %v367 = vpop.permute.xlu0 %366
  %v369 = vmul.f32 %v367, %v180
  %370 = vset.pattern.permute.xlu0 9
  %371 = vperm.xlu0 %370, %v363
  %v372 = vpop.permute.xlu0 %371
  %v374 = vmul.f32 %v372, %v185
  %v375 = vadd.f32 %v369, %v374
  %376 = vset.pattern.permute.xlu0 10
  %377 = vperm.xlu0 %376, %v363
  %v378 = vpop.permute.xlu0 %377
  %v380 = vmul.f32 %v378, %v191
  %v381 = vadd.f32 %v375, %v380
  %v382 = vadd.f32 %v159, %v381
  %v383 = vxor.u32 %v382, 2147483648
  %v384 = vmul.f32 %v383, 1.442695
  %v385 = vpow.pop %v384
  %v386 = vadd.f32 %v385, 1.0
  %v387 = vrcp.pop %v386
  %v388 = vmul.f32 1.0, %v387
  %v389 = vadd.f32 %v381, %v207
  %391 = vrot.lane.b32.xlu0 %v389, 112
  %v392 = vpop.permute.xlu0 %391
  %v394 = vmul.f32 %v388, %v392
  %396 = vrot.lane.b32.xlu0 %v394, 16
  %v397 = vpop.permute.xlu0 %396
  %v399 = vadd.f32 %v159, %v397
  %v400 = vtanh.pop %v399
  %v401 = vsub.f32 1.0, %v388
  %403 = vrot.lane.b32.xlu0 %v400, 120
  %v404 = vpop.permute.xlu0 %403
  %v406 = vmul.f32 %v401, %v404
  %v407 = vmul.f32 %v388, %v363
  %v408 = vadd.f32 %v406, %v407
  %410 = vset.pattern.permute.xlu0 8
  %411 = vperm.xlu0 %410, %v408
  %v412 = vpop.permute.xlu0 %411
  %v414 = vmul.f32 %v412, %v180
  %415 = vset.pattern.permute.xlu0 9
  %416 = vperm.xlu0 %415, %v408
  %v417 = vpop.permute.xlu0 %416
  %v419 = vmul.f32 %v417, %v185
  %v420 = vadd.f32 %v414, %v419
  %421 = vset.pattern.permute.xlu0 10
  %422 = vperm.xlu0 %421, %v408
  %v423 = vpop.permute.xlu0 %422
  %v425 = vmul.f32 %v423, %v191
  %v426 = vadd.f32 %v420, %v425
  %v427 = vadd.f32 %v164, %v426
  %v428 = vxor.u32 %v427, 2147483648
  %v429 = vmul.f32 %v428, 1.442695
  %v430 = vpow.pop %v429
  %v431 = vadd.f32 %v430, 1.0
  %v432 = vrcp.pop %v431
  %v433 = vmul.f32 1.0, %v432
  %v434 = vadd.f32 %v426, %v207
  %436 = vrot.lane.b32.xlu0 %v434, 112
  %v437 = vpop.permute.xlu0 %436
  %v439 = vmul.f32 %v433, %v437
  %441 = vrot.lane.b32.xlu0 %v439, 16
  %v442 = vpop.permute.xlu0 %441
  %v444 = vadd.f32 %v164, %v442
  %v445 = vtanh.pop %v444
  %v446 = vsub.f32 1.0, %v433
  %448 = vrot.lane.b32.xlu0 %v445, 120
  %v449 = vpop.permute.xlu0 %448
  %v451 = vmul.f32 %v446, %v449
  %v452 = vmul.f32 %v433, %v408
  %v453 = vadd.f32 %v451, %v452
  %455 = vset.pattern.permute.xlu0 8
  %456 = vperm.xlu0 %455, %v453
  %v457 = vpop.permute.xlu0 %456
  %v459 = vmul.f32 %v457, %v180
  %460 = vset.pattern.permute.xlu0 9
  %461 = vperm.xlu0 %460, %v453
  %v462 = vpop.permute.xlu0 %461
  %v464 = vmul.f32 %v462, %v185
  %v465 = vadd.f32 %v459, %v464
  %466 = vset.pattern.permute.xlu0 10
  %467 = vperm.xlu0 %466, %v453
  %v468 = vpop.permute.xlu0 %467
  %v470 = vmul.f32 %v468, %v191
  %v471 = vadd.f32 %v465, %v470
  %v472 = vadd.f32 %v169, %v471
  %v473 = vxor.u32 %v472, 2147483648
  %v474 = vmul.f32 %v473, 1.442695
  %v475 = vpow.pop %v474
  %v476 = vadd.f32 %v475, 1.0
  %v477 = vrcp.pop %v476
  %v478 = vmul.f32 1.0, %v477
  %v479 = vadd.f32 %v471, %v207
  %481 = vrot.lane.b32.xlu0 %v479, 112
  %v482 = vpop.permute.xlu0 %481
  %v484 = vmul.f32 %v478, %v482
  %486 = vrot.lane.b32.xlu0 %v484, 16
  %v487 = vpop.permute.xlu0 %486
  %v489 = vadd.f32 %v169, %v487
  %v490 = vtanh.pop %v489
  %v491 = vsub.f32 1.0, %v478
  %493 = vrot.lane.b32.xlu0 %v490, 120
  %v494 = vpop.permute.xlu0 %493
  %v496 = vmul.f32 %v491, %v494
  %v497 = vmul.f32 %v478, %v453
  %v498 = vadd.f32 %v496, %v497
  %500 = vset.pattern.permute.xlu0 8
  %501 = vperm.xlu0 %500, %v498
  %v502 = vpop.permute.xlu0 %501
  %v504 = vmul.f32 %v502, %v180
  %505 = vset.pattern.permute.xlu0 9
  %506 = vperm.xlu0 %505, %v498
  %v507 = vpop.permute.xlu0 %506
  %v509 = vmul.f32 %v507, %v185
  %v510 = vadd.f32 %v504, %v509
  %511 = vset.pattern.permute.xlu0 10
  %512 = vperm.xlu0 %511, %v498
  %v513 = vpop.permute.xlu0 %512
  %v515 = vmul.f32 %v513, %v191
  %v516 = vadd.f32 %v510, %v515
  %v517 = vadd.f32 %v174, %v516
  %v518 = vxor.u32 %v517, 2147483648
  %v519 = vmul.f32 %v518, 1.442695
  %v520 = vpow.pop %v519
  %v521 = vadd.f32 %v520, 1.0
  %v522 = vrcp.pop %v521
  %v523 = vmul.f32 1.0, %v522
  %v524 = vadd.f32 %v516, %v207
  %526 = vrot.lane.b32.xlu0 %v524, 112
  %v527 = vpop.permute.xlu0 %526
  %v529 = vmul.f32 %v523, %v527
  %531 = vrot.lane.b32.xlu0 %v529, 16
  %v532 = vpop.permute.xlu0 %531
  %v534 = vadd.f32 %v174, %v532
  %v535 = vtanh.pop %v534
  %v536 = vsub.f32 1.0, %v523
  %538 = vrot.lane.b32.xlu0 %v535, 120
  %v539 = vpop.permute.xlu0 %538
  %v541 = vmul.f32 %v536, %v539
  %v542 = vmul.f32 %v523, %v498
  %v543 = vadd.f32 %v541, %v542
  %v544 = vld [vmem:[%s1] sm:$0xff]
  %v545 = vld [vmem:[%s4] sm:$0xff]
  %v546 = vld [vmem:[%s4 + $0x8] sm:$0xff]
  %v547 = vld [vmem:[%s4 + $0x10] sm:$0x3]
  %v548 = vld [vmem:[%s5] sm:$0xff]
  %550 = vrot.lane.b32.xlu0 %v543, 120
  %v551 = vpop.permute.xlu0 %550
  %v552 = vsel %vm47, %v551, 0
  %554 = vmatprep.subr.mxu0 0.0
  %555 = vmatpush1.msra.mxu0 0.0
  %556 = vmatprep.subr.mxu0 0.0
  %557 = vmatpush1.msra.mxu0 0.0
  %558 = vmatprep.subr.mxu0 0.0
  %559 = vmatpush1.msra.mxu0 0.0
  %560 = vmatprep.subr.mxu0 0.0
  %561 = vmatpush1.msra.mxu0 0.0
  %562 = vmatprep.subr.mxu0 0.0
  %563 = vmatpush1.msra.mxu0 0.0
  %564 = vmatprep.subr.mxu0 0.0
  %565 = vmatpush1.msra.mxu0 0.0
  %566 = vmatprep.subr.mxu0 0.0
  %567 = vmatpush1.msra.mxu0 0.0
  %568 = vmatprep.subr.mxu0 0.0
  %569 = vmatpush1.msra.mxu0 0.0
  %570 = vmatprep.subr.mxu0 0.0
  %571 = vmatpush1.msra.mxu0 0.0
  %572 = vmatprep.subr.mxu0 0.0
  %573 = vmatpush1.msra.mxu0 0.0
  %574 = vmatprep.subr.mxu0 0.0
  %575 = vmatpush1.msra.mxu0 0.0
  %576 = vmatprep.subr.mxu0 0.0
  %577 = vmatpush1.msra.mxu0 0.0
  %578 = vmatprep.subr.mxu0 0.0
  %579 = vmatpush1.msra.mxu0 0.0
  %580 = vmatprep.subr.mxu0 0.0
  %581 = vmatpush1.msra.mxu0 0.0
  %582 = vmatprep.subr.mxu0 0.0
  %583 = vmatpush1.msra.mxu0 0.0
  %584 = vmatprep.subr.mxu0 0.0
  %585 = vmatpush1.msra.mxu0 %v548
  %586 = vmatprep.subr.mxu0 0.0
  %587 = vmatpush2.msra.mxu0 0.0
  %588 = vmatprep.subr.mxu0 0.0
  %589 = vmatpush2.msra.mxu0 0.0
  %590 = vmatprep.subr.mxu0 0.0
  %591 = vmatpush2.msra.mxu0 0.0
  %592 = vmatprep.subr.mxu0 0.0
  %593 = vmatpush2.msra.mxu0 0.0
  %594 = vmatprep.subr.mxu0 0.0
  %595 = vmatpush2.msra.mxu0 0.0
  %596 = vmatprep.subr.mxu0 0.0
  %597 = vmatpush2.msra.mxu0 0.0
  %598 = vmatprep.subr.mxu0 0.0
  %599 = vmatpush2.msra.mxu0 0.0
  %600 = vmatprep.subr.mxu0 0.0
  %601 = vmatpush2.msra.mxu0 0.0
  %602 = vmatprep.subr.mxu0 0.0
  %603 = vmatpush2.msra.mxu0 0.0
  %604 = vmatprep.subr.mxu0 0.0
  %605 = vmatpush2.msra.mxu0 0.0
  %606 = vmatprep.subr.mxu0 0.0
  %607 = vmatpush2.msra.mxu0 0.0
  %608 = vmatprep.subr.mxu0 0.0
  %609 = vmatpush2.msra.mxu0 0.0
  %610 = vmatprep.subr.mxu0 0.0
  %611 = vmatpush2.msra.mxu0 0.0
  %612 = vmatprep.subr.mxu0 0.0
  %613 = vmatpush2.msra.mxu0 0.0
  %614 = vmatprep.subr.mxu0 0.0
  %615 = vmatpush2.msra.mxu0 0.0
  %616 = vmatprep.subr.mxu0 0.0
  %617 = vmatpush2.msra.mxu0 0.0
  %618 = vmatprep.mubr.f32.mxu0 0.0
  %619 = vmatmul.mubr.f32.gmra.mxu0 %v552
  %v620 = vpop.f32.mrf.mxu0
  %v621 = vadd.f32 0.0, %v620
  %v622 = vpop.f32.mrf.mxu0
  %623 = vdwg.mxu0
  %vm624 = vcmask 146432
  %v626 = vsel %vm624, %v544, 0
  %vm628 = vcmask 1041408
  %v630 = vsel %vm628, %v547, 0
  %632 = vmatprep.subr.mxu0 0.0
  %633 = vmatpush1.msra.mxu0 0.0
  %634 = vmatprep.subr.mxu0 0.0
  %635 = vmatpush1.msra.mxu0 0.0
  %636 = vmatprep.subr.mxu0 0.0
  %637 = vmatpush1.msra.mxu0 0.0
  %638 = vmatprep.subr.mxu0 0.0
  %639 = vmatpush1.msra.mxu0 0.0
  %640 = vmatprep.subr.mxu0 0.0
  %641 = vmatpush1.msra.mxu0 0.0
  %642 = vmatprep.subr.mxu0 0.0
  %643 = vmatpush1.msra.mxu0 0.0
  %644 = vmatprep.subr.mxu0 0.0
  %645 = vmatpush1.msra.mxu0 0.0
  %646 = vmatprep.subr.mxu0 0.0
  %647 = vmatpush1.msra.mxu0 0.0
  %648 = vmatprep.subr.mxu0 0.0
  %649 = vmatpush1.msra.mxu0 0.0
  %650 = vmatprep.subr.mxu0 0.0
  %651 = vmatpush1.msra.mxu0 0.0
  %652 = vmatprep.subr.mxu0 0.0
  %653 = vmatpush1.msra.mxu0 0.0
  %654 = vmatprep.subr.mxu0 0.0
  %655 = vmatpush1.msra.mxu0 0.0
  %656 = vmatprep.subr.mxu0 0.0
  %657 = vmatpush1.msra.mxu0 0.0
  %658 = vmatprep.subr.mxu0 0.0
  %659 = vmatpush1.msra.mxu0 %v630
  %660 = vmatprep.subr.mxu0 0.0
  %661 = vmatpush1.msra.mxu0 %v546
  %662 = vmatprep.subr.mxu0 0.0
  %663 = vmatpush1.msra.mxu0 %v545
  %664 = vmatprep.subr.mxu0 0.0
  %665 = vmatpush2.msra.mxu0 0.0
  %666 = vmatprep.subr.mxu0 0.0
  %667 = vmatpush2.msra.mxu0 0.0
  %668 = vmatprep.subr.mxu0 0.0
  %669 = vmatpush2.msra.mxu0 0.0
  %670 = vmatprep.subr.mxu0 0.0
  %671 = vmatpush2.msra.mxu0 0.0
  %672 = vmatprep.subr.mxu0 0.0
  %673 = vmatpush2.msra.mxu0 0.0
  %674 = vmatprep.subr.mxu0 0.0
  %675 = vmatpush2.msra.mxu0 0.0
  %676 = vmatprep.subr.mxu0 0.0
  %677 = vmatpush2.msra.mxu0 0.0
  %678 = vmatprep.subr.mxu0 0.0
  %679 = vmatpush2.msra.mxu0 0.0
  %680 = vmatprep.subr.mxu0 0.0
  %681 = vmatpush2.msra.mxu0 0.0
  %682 = vmatprep.subr.mxu0 0.0
  %683 = vmatpush2.msra.mxu0 0.0
  %684 = vmatprep.subr.mxu0 0.0
  %685 = vmatpush2.msra.mxu0 0.0
  %686 = vmatprep.subr.mxu0 0.0
  %687 = vmatpush2.msra.mxu0 0.0
  %688 = vmatprep.subr.mxu0 0.0
  %689 = vmatpush2.msra.mxu0 0.0
  %690 = vmatprep.subr.mxu0 0.0
  %691 = vmatpush2.msra.mxu0 0.0
  %692 = vmatprep.subr.mxu0 0.0
  %693 = vmatpush2.msra.mxu0 0.0
  %694 = vmatprep.subr.mxu0 0.0
  %695 = vmatpush2.msra.mxu0 0.0
  %696 = vmatprep.mubr.f32.mxu0 0.0
  %697 = vmatmul.mubr.f32.gmra.mxu0 %v626
  %v698 = vpop.f32.mrf.mxu0
  %v699 = vadd.f32 %v621, %v698
  %v700 = vpop.f32.mrf.mxu0
  %701 = vdwg.mxu0
  %v702 = vmax.f32 %v699, 0.0
  %v703 = vld [vmem:[%s6] sm:$0xff]
  %v704 = vld [vmem:[%s6 + $0x8] sm:$0xff]
  %v705 = vld [vmem:[%s6 + $0x10] sm:$0xff]
  %v706 = vld [vmem:[%s6 + $0x18] sm:$0xff]
  %v707 = vld [vmem:[%s6 + $0x20] sm:$0xff]
  %v708 = vld [vmem:[%s6 + $0x28] sm:$0xff]
  %v709 = vld [vmem:[%s6 + $0x30] sm:$0xff]
  %v710 = vld [vmem:[%s6 + $0x38] sm:$0xff]
  %v711 = vld [vmem:[%s6 + $0x40] sm:$0xff]
  %v712 = vld [vmem:[%s6 + $0x48] sm:$0xff]
  %v713 = vld [vmem:[%s6 + $0x50] sm:$0xff]
  %v714 = vld [vmem:[%s6 + $0x58] sm:$0xff]
  %v715 = vld [vmem:[%s6 + $0x60] sm:$0xff]
  %v716 = vld [vmem:[%s6 + $0x68] sm:$0xff]
  %v717 = vld [vmem:[%s6 + $0x70] sm:$0xff]
  %v718 = vld [vmem:[%s6 + $0x78] sm:$0xff]
  %v719 = vlaneseq
  %v720 = vshrl.u32 %v719, 7
  %v721 = vsub.s32 2, %v720
  %v722 = vrot.slane %v33, %v721
  %723 = vmatprep.subr.mxu0 0.0
  %724 = vmatpush1.msra.mxu0 %v718
  %725 = vmatprep.subr.mxu0 0.0
  %726 = vmatpush1.msra.mxu0 %v717
  %727 = vmatprep.subr.mxu0 0.0
  %728 = vmatpush1.msra.mxu0 %v716
  %729 = vmatprep.subr.mxu0 0.0
  %730 = vmatpush1.msra.mxu0 %v715
  %731 = vmatprep.subr.mxu0 0.0
  %732 = vmatpush1.msra.mxu0 %v714
  %733 = vmatprep.subr.mxu0 0.0
  %734 = vmatpush1.msra.mxu0 %v713
  %735 = vmatprep.subr.mxu0 0.0
  %736 = vmatpush1.msra.mxu0 %v712
  %737 = vmatprep.subr.mxu0 0.0
  %738 = vmatpush1.msra.mxu0 %v711
  %739 = vmatprep.subr.mxu0 0.0
  %740 = vmatpush1.msra.mxu0 %v710
  %741 = vmatprep.subr.mxu0 0.0
  %742 = vmatpush1.msra.mxu0 %v709
  %743 = vmatprep.subr.mxu0 0.0
  %744 = vmatpush1.msra.mxu0 %v708
  %745 = vmatprep.subr.mxu0 0.0
  %746 = vmatpush1.msra.mxu0 %v707
  %747 = vmatprep.subr.mxu0 0.0
  %748 = vmatpush1.msra.mxu0 %v706
  %749 = vmatprep.subr.mxu0 0.0
  %750 = vmatpush1.msra.mxu0 %v705
  %751 = vmatprep.subr.mxu0 0.0
  %752 = vmatpush1.msra.mxu0 %v704
  %753 = vmatprep.subr.mxu0 0.0
  %754 = vmatpush1.msra.mxu0 %v703
  %755 = vmatprep.subr.mxu0 0.0
  %756 = vmatpush2.msra.mxu0 0.0
  %757 = vmatprep.subr.mxu0 0.0
  %758 = vmatpush2.msra.mxu0 0.0
  %759 = vmatprep.subr.mxu0 0.0
  %760 = vmatpush2.msra.mxu0 0.0
  %761 = vmatprep.subr.mxu0 0.0
  %762 = vmatpush2.msra.mxu0 0.0
  %763 = vmatprep.subr.mxu0 0.0
  %764 = vmatpush2.msra.mxu0 0.0
  %765 = vmatprep.subr.mxu0 0.0
  %766 = vmatpush2.msra.mxu0 0.0
  %767 = vmatprep.subr.mxu0 0.0
  %768 = vmatpush2.msra.mxu0 0.0
  %769 = vmatprep.subr.mxu0 0.0
  %770 = vmatpush2.msra.mxu0 0.0
  %771 = vmatprep.subr.mxu0 0.0
  %772 = vmatpush2.msra.mxu0 0.0
  %773 = vmatprep.subr.mxu0 0.0
  %774 = vmatpush2.msra.mxu0 0.0
  %775 = vmatprep.subr.mxu0 0.0
  %776 = vmatpush2.msra.mxu0 0.0
  %777 = vmatprep.subr.mxu0 0.0
  %778 = vmatpush2.msra.mxu0 0.0
  %779 = vmatprep.subr.mxu0 0.0
  %780 = vmatpush2.msra.mxu0 0.0
  %781 = vmatprep.subr.mxu0 0.0
  %782 = vmatpush2.msra.mxu0 0.0
  %783 = vmatprep.subr.mxu0 0.0
  %784 = vmatpush2.msra.mxu0 0.0
  %785 = vmatprep.subr.mxu0 0.0
  %786 = vmatpush2.msra.mxu0 0.0
  %787 = vmatprep.mubr.f32.mxu0 0.0
  %788 = vmatmul.mubr.f32.gmra.mxu0 %v702
  %v789 = vpop.f32.mrf.mxu0
  %v790 = vadd.f32 %v722, %v789
  %v791 = vpop.f32.mrf.mxu0
  %792 = vdwg.mxu0
  %v793 = vmax.f32 %v790, 0.0
  %v794 = vld [vmem:[%s7] sm:$0xff]
  %v795 = vld [vmem:[%s7 + $0x8] sm:$0xff]
  %v796 = vld [vmem:[%s7 + $0x10] sm:$0xff]
  %v797 = vld [vmem:[%s7 + $0x18] sm:$0xff]
  %v798 = vld [vmem:[%s7 + $0x20] sm:$0xff]
  %v799 = vld [vmem:[%s7 + $0x28] sm:$0xff]
  %v800 = vld [vmem:[%s7 + $0x30] sm:$0xff]
  %v801 = vld [vmem:[%s7 + $0x38] sm:$0xff]
  %v802 = vlaneseq
  %v803 = vshrl.u32 %v802, 7
  %v804 = vsub.s32 3, %v803
  %v805 = vrot.slane %v33, %v804
  %vm806 = vcmask 523264
  %v808 = vsel %vm806, %v793, 0
  %810 = vmatprep.subr.mxu0 0.0
  %811 = vmatpush1.msra.mxu0 0.0
  %812 = vmatprep.subr.mxu0 0.0
  %813 = vmatpush1.msra.mxu0 0.0
  %814 = vmatprep.subr.mxu0 0.0
  %815 = vmatpush1.msra.mxu0 0.0
  %816 = vmatprep.subr.mxu0 0.0
  %817 = vmatpush1.msra.mxu0 0.0
  %818 = vmatprep.subr.mxu0 0.0
  %819 = vmatpush1.msra.mxu0 0.0
  %820 = vmatprep.subr.mxu0 0.0
  %821 = vmatpush1.msra.mxu0 0.0
  %822 = vmatprep.subr.mxu0 0.0
  %823 = vmatpush1.msra.mxu0 0.0
  %824 = vmatprep.subr.mxu0 0.0
  %825 = vmatpush1.msra.mxu0 0.0
  %826 = vmatprep.subr.mxu0 0.0
  %827 = vmatpush1.msra.mxu0 %v801
  %828 = vmatprep.subr.mxu0 0.0
  %829 = vmatpush1.msra.mxu0 %v800
  %830 = vmatprep.subr.mxu0 0.0
  %831 = vmatpush1.msra.mxu0 %v799
  %832 = vmatprep.subr.mxu0 0.0
  %833 = vmatpush1.msra.mxu0 %v798
  %834 = vmatprep.subr.mxu0 0.0
  %835 = vmatpush1.msra.mxu0 %v797
  %836 = vmatprep.subr.mxu0 0.0
  %837 = vmatpush1.msra.mxu0 %v796
  %838 = vmatprep.subr.mxu0 0.0
  %839 = vmatpush1.msra.mxu0 %v795
  %840 = vmatprep.subr.mxu0 0.0
  %841 = vmatpush1.msra.mxu0 %v794
  %842 = vmatprep.subr.mxu0 0.0
  %843 = vmatpush2.msra.mxu0 0.0
  %844 = vmatprep.subr.mxu0 0.0
  %845 = vmatpush2.msra.mxu0 0.0
  %846 = vmatprep.subr.mxu0 0.0
  %847 = vmatpush2.msra.mxu0 0.0
  %848 = vmatprep.subr.mxu0 0.0
  %849 = vmatpush2.msra.mxu0 0.0
  %850 = vmatprep.subr.mxu0 0.0
  %851 = vmatpush2.msra.mxu0 0.0
  %852 = vmatprep.subr.mxu0 0.0
  %853 = vmatpush2.msra.mxu0 0.0
  %854 = vmatprep.subr.mxu0 0.0
  %855 = vmatpush2.msra.mxu0 0.0
  %856 = vmatprep.subr.mxu0 0.0
  %857 = vmatpush2.msra.mxu0 0.0
  %858 = vmatprep.subr.mxu0 0.0
  %859 = vmatpush2.msra.mxu0 0.0
  %860 = vmatprep.subr.mxu0 0.0
  %861 = vmatpush2.msra.mxu0 0.0
  %862 = vmatprep.subr.mxu0 0.0
  %863 = vmatpush2.msra.mxu0 0.0
  %864 = vmatprep.subr.mxu0 0.0
  %865 = vmatpush2.msra.mxu0 0.0
  %866 = vmatprep.subr.mxu0 0.0
  %867 = vmatpush2.msra.mxu0 0.0
  %868 = vmatprep.subr.mxu0 0.0
  %869 = vmatpush2.msra.mxu0 0.0
  %870 = vmatprep.subr.mxu0 0.0
  %871 = vmatpush2.msra.mxu0 0.0
  %872 = vmatprep.subr.mxu0 0.0
  %873 = vmatpush2.msra.mxu0 0.0
  %874 = vmatprep.mubr.f32.mxu0 0.0
  %875 = vmatmul.mubr.f32.gmra.mxu0 %v808
  %v876 = vpop.f32.mrf.mxu0
  %v877 = vadd.f32 %v805, %v876
  %v878 = vpop.f32.mrf.mxu0
  %879 = vdwg.mxu0
  %880 = vst [vmem:[%s9] sm:$0xff] %v877
  // Predicated region
  $region38: #{dqn_pallas.1} parent=0 // pred_check
    _
  $region39: #{dqn_pallas.1} parent=0 // pred_check_branch
    %882 = sbr.rel (0) target = $region41
  $region40: #{dqn_pallas.1} parent=0 // pred_region
    _
  $region41: #{dqn_pallas.1} parent=0 // pred_fallthru
    _
  // Predicated region
  $region42: #{dqn_pallas.1} parent=0 // pred_check
    _
  $region43: #{dqn_pallas.1} parent=0 // pred_check_branch
    %884 = sbr.rel (0) target = $region45
  $region44: #{dqn_pallas.1} parent=0 // pred_region
    _
  $region45: #{dqn_pallas.1} parent=0 // pred_fallthru
    _

</llo_original>
